<compile_context>
chip_gen: v7x
topology: tpu7x:2x2x1
jax: 0.10.0
libtpu: 0.0.40
codegen_flags: <defaults>
</compile_context>

<pallas_src>
import jax
import jax.numpy as jnp
import numpy as np
from jax.experimental import pallas as pl
from jax.experimental.pallas import tpu as pltpu


def _round_up(x, m):
    return ((x + m - 1) // m) * m


# ---------------------------------------------------------------------------
# Kernel 1: attention + LSTM cell (one batch tile per grid step)
# ---------------------------------------------------------------------------
def attn_lstm_kernel(emb_ref, h_ref, c_ref, enc_ref, mask_ref,
                     w_att_h_ref, w_att_e_ref, b_att_ref, v_att_ref,
                     w_ih_e_ref, w_ih_c_ref, w_hh_ref, b_lstm_ref,
                     h_out_ref, c_out_ref, attn_ref, h_bf_ref, ctx_bf_ref):
    D = h_out_ref.shape[1]
    emb_bf = emb_ref[...]                              # (TB, E)       bf16
    h_bf = h_ref[...]                                  # (TB, D)       bf16
    enc_bf = enc_ref[...]                              # (TB, S, ENC)  bf16
    TB, S, ENC = enc_bf.shape

    # ---- attention: concat split into two matmuls (both on the MXU) ----
    h_part = jnp.dot(h_bf, w_att_h_ref[...],
                     preferred_element_type=jnp.float32)                  # (TB, D)
    enc_part = jnp.dot(enc_bf.reshape(TB * S, ENC), w_att_e_ref[...],
                       preferred_element_type=jnp.float32)                # (TB*S, D)
    feat = jnp.tanh(enc_part.reshape(TB, S, D)
                    + h_part[:, None, :]
                    + b_att_ref[...].reshape(1, 1, D))                    # (TB,S,D) f32
    scores = jnp.sum(feat * v_att_ref[...].reshape(1, 1, D), axis=2)      # (TB, S)
    scores = jnp.where(mask_ref[...] > 0, scores, -1000000000.0)
    s_max = jnp.max(scores, axis=1, keepdims=True)
    e = jnp.exp(scores - s_max)
    attn = e / jnp.sum(e, axis=1, keepdims=True)                          # (TB, S) f32

    # context[b] = sum_s attn[b,s] * enc[b,s,:]  -- batched bf16 MXU contraction
    # (avoids materializing an f32 (TB,S,ENC) temporary).
    attn_bf = attn.astype(jnp.bfloat16)
    context = jnp.einsum("bqs,bse->bqe", attn_bf[:, None, :], enc_bf,
                         preferred_element_type=jnp.float32)[:, 0, :]     # (TB, ENC) f32
    ctx_bf = context.astype(jnp.bfloat16)

    # ---- LSTM cell: concat split into three matmuls ----
    gates = (jnp.dot(emb_bf, w_ih_e_ref[...], preferred_element_type=jnp.float32)
             + jnp.dot(ctx_bf, w_ih_c_ref[...], preferred_element_type=jnp.float32)
             + jnp.dot(h_bf, w_hh_ref[...], preferred_element_type=jnp.float32)
             + b_lstm_ref[...])                                           # (TB, 4D) f32
    i_g = jax.nn.sigmoid(gates[:, 0:D])
    f_g = jax.nn.sigmoid(gates[:, D:2 * D])
    g_g = jnp.tanh(gates[:, 2 * D:3 * D])
    o_g = jax.nn.sigmoid(gates[:, 3 * D:4 * D])
    c_new = f_g * c_ref[...] + i_g * g_g
    h_new = o_g * jnp.tanh(c_new)

    h_out_ref[...] = h_new
    c_out_ref[...] = c_new
    attn_ref[...] = attn
    h_bf_ref[...] = h_new.astype(jnp.bfloat16)     # bf16 hand-off to projection
    ctx_bf_ref[...] = ctx_bf


# ---------------------------------------------------------------------------
# Kernel 2: vocab-tiled output projection (concat split into three matmuls)
# ---------------------------------------------------------------------------
def vocab_proj_kernel(h_ref, ctx_ref, emb_ref,
                      w_h_ref, w_c_ref, w_e_ref, b_ref, logits_ref):
    logits_ref[...] = (
        jnp.dot(h_ref[...], w_h_ref[...], preferred_element_type=jnp.float32)
        + jnp.dot(ctx_ref[...], w_c_ref[...], preferred_element_type=jnp.float32)
        + jnp.dot(emb_ref[...], w_e_ref[...], preferred_element_type=jnp.float32)
        + b_ref[...])


# ---------------------------------------------------------------------------
# One-time weight preprocessing (hoisted out of the decode step).
# ---------------------------------------------------------------------------
def prepare_decoder_params(params, *, max_tv=1024):
    V, E = params["emb_table"].shape
    D = params["w_hh"].shape[0]
    ENC = params["w_att"].shape[0] - D

    # vocab tiling: full-dim block (no padding) when V is small, otherwise
    # 1024-wide tiles (multiple of 128) with minimal padding.
    if V <= max_tv:
        TV, V_pad = V, V
    else:
        TV = max_tv
        V_pad = _round_up(V, TV)

    w_att = params["w_att"].astype(jnp.float32)            # (D+ENC, D)
    w_ih = params["w_ih"].astype(jnp.float32)              # (E+ENC, 4D)
    w_proj = params["w_proj"].astype(jnp.float32)          # (D+ENC+E, V)
    b_proj = params["b_proj"].astype(jnp.float32)          # (1, V)
    if V_pad != V:
        w_proj = jnp.pad(w_proj, ((0, 0), (0, V_pad - V)))
        b_proj = jnp.pad(b_proj, ((0, 0), (0, V_pad - V)))

    return {
        "emb_table": params["emb_table"].astype(jnp.float32),
        "w_att_h": w_att[:D].astype(jnp.bfloat16),
        "w_att_e": w_att[D:].astype(jnp.bfloat16),
        "b_att": params["b_att"].astype(jnp.float32).reshape(1, D),
        "v_att": params["v_att"].astype(jnp.float32).reshape(1, D),
        "w_ih_e": w_ih[:E].astype(jnp.bfloat16),
        "w_ih_c": w_ih[E:].astype(jnp.bfloat16),
        "w_hh": params["w_hh"].astype(jnp.bfloat16),
        "b_lstm": params["b_lstm"].astype(jnp.float32).reshape(1, 4 * D),
        "w_proj_h": w_proj[:D].astype(jnp.bfloat16),
        "w_proj_c": w_proj[D:D + ENC].astype(jnp.bfloat16),
        "w_proj_e": w_proj[D + ENC:].astype(jnp.bfloat16),
        "b_proj": b_proj,
        "dims": dict(V=V, V_pad=V_pad, TV=TV, E=E, ENC=ENC, D=D),
    }


# ---------------------------------------------------------------------------
# Per-step wrapper.
# ---------------------------------------------------------------------------
def target_decoder_step(prepped, token, h, c, encoder_outputs, attention_mask):
    dims = prepped["dims"]
    D, E, ENC = dims["D"], dims["E"], dims["ENC"]
    V, V_pad, TV = dims["V"], dims["V_pad"], dims["TV"]
    B, S, enc_dim = encoder_outputs.shape
    assert enc_dim == ENC

    # batch tiling (pad B to a sublane-friendly tile). Cap 128; on v6e
    # (128 MiB VMEM) this could be raised to 256 for very large B.
    TB = min(_round_up(B, 8), 128)
    B_pad = _round_up(B, TB)
    # seq padding so the in-kernel reshapes of the encoder block are layout no-ops
    S_pad = _round_up(S, 8)

    def pad_b(x):
        return jnp.pad(x, ((0, B_pad - B),) + ((0, 0),) * (x.ndim - 1))

    # per-step glue: embedding gather + padding + dtype plumbing (cheap; weights
    # are already preprocessed in `prepped`).
    emb = prepped["emb_table"][token]                                  # (B, E) f32
    emb_p = pad_b(emb).astype(jnp.bfloat16)
    h_p = pad_b(h.astype(jnp.float32)).astype(jnp.bfloat16)
    c_p = pad_b(c.astype(jnp.float32))
    enc_p = jnp.pad(encoder_outputs.astype(jnp.float32),
                    ((0, B_pad - B), (0, S_pad - S), (0, 0))).astype(jnp.bfloat16)
    mask_p = jnp.pad(attention_mask.astype(jnp.int32),
                     ((0, B_pad - B), (0, S_pad - S)))

    NB = B_pad // TB
    NV = V_pad // TV

    per_b = lambda shape: pl.BlockSpec(shape, lambda b: (b,) + (0,) * (len(shape) - 1))
    shared = lambda shape: pl.BlockSpec(shape, lambda b: (0,) * len(shape))

    # ------------------- kernel 1: attention + LSTM cell -------------------
    h_new, c_new, attn, h_bf, ctx_bf = pl.pallas_call(
        attn_lstm_kernel,
        out_shape=(
            jax.ShapeDtypeStruct((B_pad, D), jnp.float32),
            jax.ShapeDtypeStruct((B_pad, D), jnp.float32),
            jax.ShapeDtypeStruct((B_pad, S_pad), jnp.float32),
            jax.ShapeDtypeStruct((B_pad, D), jnp.bfloat16),
            jax.ShapeDtypeStruct((B_pad, ENC), jnp.bfloat16),
        ),
        grid_spec=pltpu.PrefetchScalarGridSpec(
            num_scalar_prefetch=0,
            grid=(NB,),
            in_specs=[
                per_b((TB, E)),              # embedded (bf16)
                per_b((TB, D)),              # h        (bf16)
                per_b((TB, D)),              # c        (f32)
                per_b((TB, S_pad, ENC)),     # encoder outputs (bf16)
                per_b((TB, S_pad)),          # mask     (int32)
                shared((D, D)),              # attention_transform W (h half)
                shared((ENC, D)),            # attention_transform W (enc half)
                shared((1, D)),              # attention_transform b
                shared((1, D)),              # attention_scorer W (no bias)
                shared((E, 4 * D)),          # LSTM W_ih (emb half)
                shared((ENC, 4 * D)),        # LSTM W_ih (context half)
                shared((D, 4 * D)),          # LSTM W_hh
                shared((1, 4 * D)),          # LSTM b_ih + b_hh
            ],
            out_specs=[
                per_b((TB, D)),              # new h (f32)
                per_b((TB, D)),              # new c (f32)
                per_b((TB, S_pad)),          # attention weights (f32)
                per_b((TB, D)),              # new h (bf16, for projection)
                per_b((TB, ENC)),            # context (bf16, for projection)
            ],
        ),
        compiler_params=pltpu.CompilerParams(
            dimension_semantics=("parallel",),
            vmem_limit_bytes=64 * 1024 * 1024),
    )(emb_p, h_p, c_p, enc_p, mask_p,
      prepped["w_att_h"], prepped["w_att_e"], prepped["b_att"], prepped["v_att"],
      prepped["w_ih_e"], prepped["w_ih_c"], prepped["w_hh"], prepped["b_lstm"])

    # --------------- kernel 2: vocab-tiled output projection ---------------
    # Vocab axis is OUTER so each w_proj tile keeps the same block index across
    # the inner batch loop (DMA'd exactly once); both axes are independent, so
    # both are "parallel" (vocab tiles can be megacore-sharded on v7x).
    act_spec = lambda shape: pl.BlockSpec(shape, lambda v, b: (b, 0))
    wt_spec = lambda shape: pl.BlockSpec(shape, lambda v, b: (0, v))

    logits = pl.pallas_call(
        vocab_proj_kernel,
        out_shape=jax.ShapeDtypeStruct((B_pad, V_pad), jnp.float32),
        grid_spec=pltpu.PrefetchScalarGridSpec(
            num_scalar_prefetch=0,
            grid=(NV, NB),
            in_specs=[
                act_spec((TB, D)),           # h_new  (bf16)
                act_spec((TB, ENC)),         # context (bf16)
                act_spec((TB, E)),           # embedded (bf16)
                wt_spec((D, TV)),            # output_projection W (h part)
                wt_spec((ENC, TV)),          # output_projection W (context part)
                wt_spec((E, TV)),            # output_projection W (emb part)
                wt_spec((1, TV)),            # output_projection b
            ],
            out_specs=pl.BlockSpec((TB, TV), lambda v, b: (b, v)),
        ),
        compiler_params=pltpu.CompilerParams(
            dimension_semantics=("parallel", "parallel"),
            vmem_limit_bytes=64 * 1024 * 1024),
    )(h_bf, ctx_bf, emb_p,
      prepped["w_proj_h"], prepped["w_proj_c"], prepped["w_proj_e"],
      prepped["b_proj"])

    return (logits[:B, :V],
            (h_new[:B][None], c_new[:B][None]),
            attn[:B, :S])


# ---------------------------------------------------------------------------
# Pure-JAX f32 reference mirroring the PyTorch forward semantics.
# ---------------------------------------------------------------------------
def reference_step(params, token, h, c, enc, mask):
    B, S, ENC = enc.shape
    D = h.shape[-1]
    emb = params["emb_table"][token]                               # (B, E)
    h_rep = jnp.repeat(h[:, None, :], S, axis=1)                   # (B, S, D)
    concat = jnp.concatenate([h_rep, enc], axis=2)                 # (B, S, D+ENC)
    feat = jnp.tanh(concat @ params["w_att"] + params["b_att"][0])
    scores = jnp.einsum("bsd,d->bs", feat, params["v_att"][0])
    scores = jnp.where(mask, scores, -1000000000.0)
    attn = jax.nn.softmax(scores, axis=1)
    context = jnp.einsum("bs,bse->be", attn, enc)
    x = jnp.concatenate([emb, context], axis=1)
    gates = x @ params["w_ih"] + h @ params["w_hh"] + params["b_lstm"][0]
    i_g = jax.nn.sigmoid(gates[:, 0:D])
    f_g = jax.nn.sigmoid(gates[:, D:2 * D])
    g_g = jnp.tanh(gates[:, 2 * D:3 * D])
    o_g = jax.nn.sigmoid(gates[:, 3 * D:4 * D])
    c_new = f_g * c + i_g * g_g
    h_new = o_g * jnp.tanh(c_new)
    proj_in = jnp.concatenate([h_new, context, emb], axis=1)
    logits = proj_in @ params["w_proj"] + params["b_proj"][0]
    return logits, (h_new[None], c_new[None]), attn


if __name__ == "__main__":
    # small shapes consistent with the module
    B, S = 2, 8
    VOCAB, E, ENC, D = 16, 32, 32, 32

    key = jax.random.PRNGKey(0)
    ks = jax.random.split(key, 12)
    init = lambda k, shape: (0.1 * jax.random.normal(k, shape)).astype(jnp.float32)

    params = {
        "emb_table": init(ks[0], (VOCAB, E)),
        "w_att":     init(ks[1], (D + ENC, D)),
        "b_att":     init(ks[2], (1, D)),
        "v_att":     init(ks[3], (1, D)),
        "w_ih":      init(ks[4], (E + ENC, 4 * D)),
        "w_hh":      init(ks[5], (D, 4 * D)),
        "b_lstm":    init(ks[6], (1, 4 * D)),
        "w_proj":    init(ks[7], (D + ENC + E, VOCAB)),
        "b_proj":    init(ks[8], (1, VOCAB)),
    }

    token = jax.random.randint(ks[9], (B,), 0, VOCAB)
    h0 = init(ks[10], (B, D))
    c0 = init(ks[11], (B, D))
    enc_out = (0.1 * jax.random.normal(jax.random.PRNGKey(1), (B, S, ENC))).astype(jnp.float32)
    lengths = jnp.array([S, 5], dtype=jnp.int32)
    mask = (jnp.arange(S)[None, :] < lengths[:, None])             # (B, S) bool

    # one-time weight prep (cast / split / pad), then the fused decode step
    prepped = prepare_decoder_params(params)
    logits, (h_new, c_new), attn = target_decoder_step(prepped, token, h0, c0, enc_out, mask)
    jax.block_until_ready((logits, h_new, c_new, attn))

    ref_logits, (ref_h, ref_c), ref_attn = reference_step(params, token, h0, c0, enc_out, mask)

    # Matmuls run with bf16 operands (f32 accumulation) -> compare against the
    # f32 reference with a bf16-appropriate tolerance.
    np.testing.assert_allclose(np.asarray(logits), np.asarray(ref_logits), rtol=1e-2, atol=1e-2)
    np.testing.assert_allclose(np.asarray(h_new), np.asarray(ref_h), rtol=1e-2, atol=1e-2)
    np.testing.assert_allclose(np.asarray(c_new), np.asarray(ref_c), rtol=1e-2, atol=1e-2)
    np.testing.assert_allclose(np.asarray(attn), np.asarray(ref_attn), rtol=1e-2, atol=1e-2)

    print("KERNEL_OK")
</pallas_src>

<mosaic_0001>
module attributes {stable_mosaic.version = 11 : i64} {
  func.func @attn_lstm_kernel(%arg0: i32, %arg1: memref<8x32xbf16, #tpu.memory_space<vmem>>, %arg2: memref<8x32xbf16, #tpu.memory_space<vmem>>, %arg3: memref<8x32xf32, #tpu.memory_space<vmem>>, %arg4: memref<8x8x32xbf16, #tpu.memory_space<vmem>>, %arg5: memref<8x8xi32, #tpu.memory_space<vmem>>, %arg6: memref<32x32xbf16, #tpu.memory_space<vmem>>, %arg7: memref<32x32xbf16, #tpu.memory_space<vmem>>, %arg8: memref<1x32xf32, #tpu.memory_space<vmem>>, %arg9: memref<1x32xf32, #tpu.memory_space<vmem>>, %arg10: memref<32x128xbf16, #tpu.memory_space<vmem>>, %arg11: memref<32x128xbf16, #tpu.memory_space<vmem>>, %arg12: memref<32x128xbf16, #tpu.memory_space<vmem>>, %arg13: memref<1x128xf32, #tpu.memory_space<vmem>>, %arg14: memref<8x32xf32, #tpu.memory_space<vmem>>, %arg15: memref<8x32xf32, #tpu.memory_space<vmem>>, %arg16: memref<8x8xf32, #tpu.memory_space<vmem>>, %arg17: memref<8x32xbf16, #tpu.memory_space<vmem>>, %arg18: memref<8x32xbf16, #tpu.memory_space<vmem>>) attributes {dimension_semantics = [#tpu.dimension_semantics<parallel>], iteration_bounds = array<i64: 1>, scalar_prefetch = 0 : i64, scratch_operands = 0 : i64, tpu.core_type = #tpu.core_type<tc>, window_params = [{transform_indices = @transform_0, window_bounds = array<i64: 8, 32>}, {transform_indices = @transform_1, window_bounds = array<i64: 8, 32>}, {transform_indices = @transform_2, window_bounds = array<i64: 8, 32>}, {transform_indices = @transform_3, window_bounds = array<i64: 8, 8, 32>}, {transform_indices = @transform_4, window_bounds = array<i64: 8, 8>}, {pipeline_mode = #tpu.pipeline_mode<synchronous>, transform_indices = @transform_5, window_bounds = array<i64: 32, 32>}, {pipeline_mode = #tpu.pipeline_mode<synchronous>, transform_indices = @transform_6, window_bounds = array<i64: 32, 32>}, {pipeline_mode = #tpu.pipeline_mode<synchronous>, transform_indices = @transform_7, window_bounds = array<i64: 1, 32>}, {pipeline_mode = #tpu.pipeline_mode<synchronous>, transform_indices = @transform_8, window_bounds = array<i64: 1, 32>}, {pipeline_mode = #tpu.pipeline_mode<synchronous>, transform_indices = @transform_9, window_bounds = array<i64: 32, 128>}, {pipeline_mode = #tpu.pipeline_mode<synchronous>, transform_indices = @transform_10, window_bounds = array<i64: 32, 128>}, {pipeline_mode = #tpu.pipeline_mode<synchronous>, transform_indices = @transform_11, window_bounds = array<i64: 32, 128>}, {pipeline_mode = #tpu.pipeline_mode<synchronous>, transform_indices = @transform_12, window_bounds = array<i64: 1, 128>}, {transform_indices = @transform_13, window_bounds = array<i64: 8, 32>}, {transform_indices = @transform_14, window_bounds = array<i64: 8, 32>}, {transform_indices = @transform_15, window_bounds = array<i64: 8, 8>}, {transform_indices = @transform_16, window_bounds = array<i64: 8, 32>}, {transform_indices = @transform_17, window_bounds = array<i64: 8, 32>}]} {
    %c0 = arith.constant 0 : index
    %c0_0 = arith.constant 0 : index
    %0 = vector.load %arg1[%c0, %c0_0] : memref<8x32xbf16, #tpu.memory_space<vmem>>, vector<8x32xbf16>
    %c0_1 = arith.constant 0 : index
    %c0_2 = arith.constant 0 : index
    %1 = vector.load %arg2[%c0_1, %c0_2] : memref<8x32xbf16, #tpu.memory_space<vmem>>, vector<8x32xbf16>
    %c0_3 = arith.constant 0 : index
    %c0_4 = arith.constant 0 : index
    %c0_5 = arith.constant 0 : index
    %2 = vector.load %arg4[%c0_3, %c0_4, %c0_5] : memref<8x8x32xbf16, #tpu.memory_space<vmem>>, vector<8x8x32xbf16>
    %c0_6 = arith.constant 0 : index
    %c0_7 = arith.constant 0 : index
    %3 = vector.load %arg6[%c0_6, %c0_7] : memref<32x32xbf16, #tpu.memory_space<vmem>>, vector<32x32xbf16>
    %cst = arith.constant dense<0.000000e+00> : vector<8x32xf32>
    %4 = tpu.matmul %1, %3, %cst {dimension_numbers = #tpu.dot_dimension_numbers<[1], [0], [0], [1], [0, 0, 1, 1], [], []>} : vector<8x32xbf16>, vector<32x32xbf16>, vector<8x32xf32> -> vector<8x32xf32>
    %5 = vector.shape_cast %2 : vector<8x8x32xbf16> to vector<64x32xbf16>
    %c0_8 = arith.constant 0 : index
    %c0_9 = arith.constant 0 : index
    %6 = vector.load %arg7[%c0_8, %c0_9] : memref<32x32xbf16, #tpu.memory_space<vmem>>, vector<32x32xbf16>
    %cst_10 = arith.constant dense<0.000000e+00> : vector<64x32xf32>
    %7 = tpu.matmul %5, %6, %cst_10 {dimension_numbers = #tpu.dot_dimension_numbers<[1], [0], [0], [1], [0, 0, 1, 1], [], []>} : vector<64x32xbf16>, vector<32x32xbf16>, vector<64x32xf32> -> vector<64x32xf32>
    %8 = vector.shape_cast %7 : vector<64x32xf32> to vector<8x8x32xf32>
    %9 = vector.shape_cast %4 : vector<8x32xf32> to vector<8x1x32xf32>
    %10 = vector.broadcast %9 : vector<8x1x32xf32> to vector<8x8x32xf32>
    %11 = arith.addf %8, %10 : vector<8x8x32xf32>
    %c0_11 = arith.constant 0 : index
    %c0_12 = arith.constant 0 : index
    %12 = vector.load %arg8[%c0_11, %c0_12] : memref<1x32xf32, #tpu.memory_space<vmem>>, vector<1x32xf32>
    %13 = vector.shape_cast %12 : vector<1x32xf32> to vector<1x1x32xf32>
    %14 = vector.broadcast %13 : vector<1x1x32xf32> to vector<8x8x32xf32>
    %15 = arith.addf %11, %14 : vector<8x8x32xf32>
    %16 = math.tanh %15 : vector<8x8x32xf32>
    %c0_13 = arith.constant 0 : index
    %c0_14 = arith.constant 0 : index
    %17 = vector.load %arg9[%c0_13, %c0_14] : memref<1x32xf32, #tpu.memory_space<vmem>>, vector<1x32xf32>
    %18 = vector.shape_cast %17 : vector<1x32xf32> to vector<1x1x32xf32>
    %19 = vector.broadcast %18 : vector<1x1x32xf32> to vector<8x8x32xf32>
    %20 = arith.mulf %16, %19 : vector<8x8x32xf32>
    %cst_15 = arith.constant dense<0.000000e+00> : vector<8x8xf32>
    %21 = vector.multi_reduction <add>, %20, %cst_15 [2] : vector<8x8x32xf32> to vector<8x8xf32>
    %c0_16 = arith.constant 0 : index
    %c0_17 = arith.constant 0 : index
    %22 = vector.load %arg5[%c0_16, %c0_17] : memref<8x8xi32, #tpu.memory_space<vmem>>, vector<8x8xi32>
    %c0_i32 = arith.constant 0 : i32
    %23 = vector.broadcast %c0_i32 : i32 to vector<8x8xi32>
    %24 = arith.cmpi sgt, %22, %23 : vector<8x8xi32>
    %cst_18 = arith.constant -1.000000e+09 : f32
    %25 = vector.broadcast %cst_18 : f32 to vector<8x8xf32>
    %26 = arith.select %24, %21, %25 : vector<8x8xi1>, vector<8x8xf32>
    %cst_19 = arith.constant dense<0xFF800000> : vector<8xf32>
    %27 = vector.multi_reduction <maximumf>, %26, %cst_19 [1] : vector<8x8xf32> to vector<8xf32>
    %28 = vector.shape_cast %27 : vector<8xf32> to vector<8x1xf32>
    %29 = vector.broadcast %28 : vector<8x1xf32> to vector<8x8xf32>
    %30 = arith.subf %26, %29 : vector<8x8xf32>
    %31 = math.exp %30 : vector<8x8xf32>
    %cst_20 = arith.constant dense<0.000000e+00> : vector<8xf32>
    %32 = vector.multi_reduction <add>, %31, %cst_20 [1] : vector<8x8xf32> to vector<8xf32>
    %33 = vector.shape_cast %32 : vector<8xf32> to vector<8x1xf32>
    %34 = vector.broadcast %33 : vector<8x1xf32> to vector<8x8xf32>
    %35 = arith.divf %31, %34 : vector<8x8xf32>
    %36 = arith.truncf %35 : vector<8x8xf32> to vector<8x8xbf16>
    %37 = vector.shape_cast %36 : vector<8x8xbf16> to vector<8x1x8xbf16>
    "tpu.trace_start"() <{level = 10 : i32, message = "bqs,bse->bqe"}> : () -> ()
    %cst_21 = arith.constant dense<0.000000e+00> : vector<8x1x32xf32>
    %38 = tpu.matmul %37, %2, %cst_21 {dimension_numbers = #tpu.dot_dimension_numbers<[2], [1], [1], [2], [0, 0, 0, 1, 1, 2], [0], [0]>} : vector<8x1x8xbf16>, vector<8x8x32xbf16>, vector<8x1x32xf32> -> vector<8x1x32xf32>
    "tpu.trace_stop"() : () -> ()
    %39 = vector.shape_cast %38 : vector<8x1x32xf32> to vector<8x32xf32>
    %40 = arith.truncf %39 : vector<8x32xf32> to vector<8x32xbf16>
    %c0_22 = arith.constant 0 : index
    %c0_23 = arith.constant 0 : index
    %41 = vector.load %arg10[%c0_22, %c0_23] : memref<32x128xbf16, #tpu.memory_space<vmem>>, vector<32x128xbf16>
    %cst_24 = arith.constant dense<0.000000e+00> : vector<8x128xf32>
    %42 = tpu.matmul %0, %41, %cst_24 {dimension_numbers = #tpu.dot_dimension_numbers<[1], [0], [0], [1], [0, 0, 1, 1], [], []>} : vector<8x32xbf16>, vector<32x128xbf16>, vector<8x128xf32> -> vector<8x128xf32>
    %c0_25 = arith.constant 0 : index
    %c0_26 = arith.constant 0 : index
    %43 = vector.load %arg11[%c0_25, %c0_26] : memref<32x128xbf16, #tpu.memory_space<vmem>>, vector<32x128xbf16>
    %cst_27 = arith.constant dense<0.000000e+00> : vector<8x128xf32>
    %44 = tpu.matmul %40, %43, %cst_27 {dimension_numbers = #tpu.dot_dimension_numbers<[1], [0], [0], [1], [0, 0, 1, 1], [], []>} : vector<8x32xbf16>, vector<32x128xbf16>, vector<8x128xf32> -> vector<8x128xf32>
    %45 = arith.addf %42, %44 : vector<8x128xf32>
    %c0_28 = arith.constant 0 : index
    %c0_29 = arith.constant 0 : index
    %46 = vector.load %arg12[%c0_28, %c0_29] : memref<32x128xbf16, #tpu.memory_space<vmem>>, vector<32x128xbf16>
    %cst_30 = arith.constant dense<0.000000e+00> : vector<8x128xf32>
    %47 = tpu.matmul %1, %46, %cst_30 {dimension_numbers = #tpu.dot_dimension_numbers<[1], [0], [0], [1], [0, 0, 1, 1], [], []>} : vector<8x32xbf16>, vector<32x128xbf16>, vector<8x128xf32> -> vector<8x128xf32>
    %48 = arith.addf %45, %47 : vector<8x128xf32>
    %c0_31 = arith.constant 0 : index
    %c0_32 = arith.constant 0 : index
    %49 = vector.load %arg13[%c0_31, %c0_32] : memref<1x128xf32, #tpu.memory_space<vmem>>, vector<1x128xf32>
    %50 = vector.broadcast %49 : vector<1x128xf32> to vector<8x128xf32>
    %51 = arith.addf %48, %50 : vector<8x128xf32>
    %52 = vector.extract_strided_slice %51 {offsets = [0, 0], sizes = [8, 32], strides = [1, 1]} : vector<8x128xf32> to vector<8x32xf32>
    %53 = arith.negf %52 : vector<8x32xf32>
    %54 = math.exp %53 : vector<8x32xf32>
    %cst_33 = arith.constant 1.000000e+00 : f32
    %55 = vector.broadcast %cst_33 : f32 to vector<8x32xf32>
    %56 = arith.addf %55, %54 : vector<8x32xf32>
    %57 = arith.divf %55, %56 : vector<8x32xf32>
    %58 = vector.extract_strided_slice %51 {offsets = [0, 32], sizes = [8, 32], strides = [1, 1]} : vector<8x128xf32> to vector<8x32xf32>
    %59 = arith.negf %58 : vector<8x32xf32>
    %60 = math.exp %59 : vector<8x32xf32>
    %cst_34 = arith.constant 1.000000e+00 : f32
    %61 = vector.broadcast %cst_34 : f32 to vector<8x32xf32>
    %62 = arith.addf %61, %60 : vector<8x32xf32>
    %63 = arith.divf %61, %62 : vector<8x32xf32>
    %64 = vector.extract_strided_slice %51 {offsets = [0, 64], sizes = [8, 32], strides = [1, 1]} : vector<8x128xf32> to vector<8x32xf32>
    %65 = math.tanh %64 : vector<8x32xf32>
    %66 = vector.extract_strided_slice %51 {offsets = [0, 96], sizes = [8, 32], strides = [1, 1]} : vector<8x128xf32> to vector<8x32xf32>
    %67 = arith.negf %66 : vector<8x32xf32>
    %68 = math.exp %67 : vector<8x32xf32>
    %cst_35 = arith.constant 1.000000e+00 : f32
    %69 = vector.broadcast %cst_35 : f32 to vector<8x32xf32>
    %70 = arith.addf %69, %68 : vector<8x32xf32>
    %71 = arith.divf %69, %70 : vector<8x32xf32>
    %c0_36 = arith.constant 0 : index
    %c0_37 = arith.constant 0 : index
    %72 = vector.load %arg3[%c0_36, %c0_37] : memref<8x32xf32, #tpu.memory_space<vmem>>, vector<8x32xf32>
    %73 = arith.mulf %63, %72 : vector<8x32xf32>
    %74 = arith.mulf %57, %65 : vector<8x32xf32>
    %75 = arith.addf %73, %74 : vector<8x32xf32>
    %76 = math.tanh %75 : vector<8x32xf32>
    %77 = arith.mulf %71, %76 : vector<8x32xf32>
    %c0_38 = arith.constant 0 : index
    %c0_39 = arith.constant 0 : index
    %78 = vector.load %arg14[%c0_38, %c0_39] : memref<8x32xf32, #tpu.memory_space<vmem>>, vector<8x32xf32>
    tpu.vector_store %arg14[%c0_38, %c0_39], %77 {strides = array<i32>} : memref<8x32xf32, #tpu.memory_space<vmem>>, vector<8x32xf32>,
    %c0_40 = arith.constant 0 : index
    %c0_41 = arith.constant 0 : index
    %79 = vector.load %arg15[%c0_40, %c0_41] : memref<8x32xf32, #tpu.memory_space<vmem>>, vector<8x32xf32>
    tpu.vector_store %arg15[%c0_40, %c0_41], %75 {strides = array<i32>} : memref<8x32xf32, #tpu.memory_space<vmem>>, vector<8x32xf32>,
    %c0_42 = arith.constant 0 : index
    %c0_43 = arith.constant 0 : index
    %80 = vector.load %arg16[%c0_42, %c0_43] : memref<8x8xf32, #tpu.memory_space<vmem>>, vector<8x8xf32>
    tpu.vector_store %arg16[%c0_42, %c0_43], %35 {strides = array<i32>} : memref<8x8xf32, #tpu.memory_space<vmem>>, vector<8x8xf32>,
    %81 = arith.truncf %77 : vector<8x32xf32> to vector<8x32xbf16>
    %c0_44 = arith.constant 0 : index
    %c0_45 = arith.constant 0 : index
    %82 = vector.load %arg17[%c0_44, %c0_45] : memref<8x32xbf16, #tpu.memory_space<vmem>>, vector<8x32xbf16>
    tpu.vector_store %arg17[%c0_44, %c0_45], %81 {strides = array<i32>} : memref<8x32xbf16, #tpu.memory_space<vmem>>, vector<8x32xbf16>,
    %c0_46 = arith.constant 0 : index
    %c0_47 = arith.constant 0 : index
    %83 = vector.load %arg18[%c0_46, %c0_47] : memref<8x32xbf16, #tpu.memory_space<vmem>>, vector<8x32xbf16>
    tpu.vector_store %arg18[%c0_46, %c0_47], %40 {strides = array<i32>} : memref<8x32xbf16, #tpu.memory_space<vmem>>, vector<8x32xbf16>,
    return
  }
  func.func @transform_0(%arg0: i32) -> (i32, i32) {
    %c0_i32 = arith.constant 0 : i32
    %c0_i32_0 = arith.constant 0 : i32
    return %arg0, %c0_i32 : i32, i32
  }
  func.func @transform_1(%arg0: i32) -> (i32, i32) {
    %c0_i32 = arith.constant 0 : i32
    %c0_i32_0 = arith.constant 0 : i32
    return %arg0, %c0_i32 : i32, i32
  }
  func.func @transform_2(%arg0: i32) -> (i32, i32) {
    %c0_i32 = arith.constant 0 : i32
    %c0_i32_0 = arith.constant 0 : i32
    return %arg0, %c0_i32 : i32, i32
  }
  func.func @transform_3(%arg0: i32) -> (i32, i32, i32) {
    %c0_i32 = arith.constant 0 : i32
    %c0_i32_0 = arith.constant 0 : i32
    %c0_i32_1 = arith.constant 0 : i32
    return %arg0, %c0_i32, %c0_i32_0 : i32, i32, i32
  }
  func.func @transform_4(%arg0: i32) -> (i32, i32) {
    %c0_i32 = arith.constant 0 : i32
    %c0_i32_0 = arith.constant 0 : i32
    return %arg0, %c0_i32 : i32, i32
  }
  func.func @transform_5(%arg0: i32) -> (i32, i32) {
    %c0_i32 = arith.constant 0 : i32
    %c0_i32_0 = arith.constant 0 : i32
    %c0_i32_1 = arith.constant 0 : i32
    return %c0_i32, %c0_i32_0 : i32, i32
  }
  func.func @transform_6(%arg0: i32) -> (i32, i32) {
    %c0_i32 = arith.constant 0 : i32
    %c0_i32_0 = arith.constant 0 : i32
    %c0_i32_1 = arith.constant 0 : i32
    return %c0_i32, %c0_i32_0 : i32, i32
  }
  func.func @transform_7(%arg0: i32) -> (i32, i32) {
    %c0_i32 = arith.constant 0 : i32
    %c0_i32_0 = arith.constant 0 : i32
    %c0_i32_1 = arith.constant 0 : i32
    return %c0_i32, %c0_i32_0 : i32, i32
  }
  func.func @transform_8(%arg0: i32) -> (i32, i32) {
    %c0_i32 = arith.constant 0 : i32
    %c0_i32_0 = arith.constant 0 : i32
    %c0_i32_1 = arith.constant 0 : i32
    return %c0_i32, %c0_i32_0 : i32, i32
  }
  func.func @transform_9(%arg0: i32) -> (i32, i32) {
    %c0_i32 = arith.constant 0 : i32
    %c0_i32_0 = arith.constant 0 : i32
    %c0_i32_1 = arith.constant 0 : i32
    return %c0_i32, %c0_i32_0 : i32, i32
  }
  func.func @transform_10(%arg0: i32) -> (i32, i32) {
    %c0_i32 = arith.constant 0 : i32
    %c0_i32_0 = arith.constant 0 : i32
    %c0_i32_1 = arith.constant 0 : i32
    return %c0_i32, %c0_i32_0 : i32, i32
  }
  func.func @transform_11(%arg0: i32) -> (i32, i32) {
    %c0_i32 = arith.constant 0 : i32
    %c0_i32_0 = arith.constant 0 : i32
    %c0_i32_1 = arith.constant 0 : i32
    return %c0_i32, %c0_i32_0 : i32, i32
  }
  func.func @transform_12(%arg0: i32) -> (i32, i32) {
    %c0_i32 = arith.constant 0 : i32
    %c0_i32_0 = arith.constant 0 : i32
    %c0_i32_1 = arith.constant 0 : i32
    return %c0_i32, %c0_i32_0 : i32, i32
  }
  func.func @transform_13(%arg0: i32) -> (i32, i32) {
    %c0_i32 = arith.constant 0 : i32
    %c0_i32_0 = arith.constant 0 : i32
    return %arg0, %c0_i32 : i32, i32
  }
  func.func @transform_14(%arg0: i32) -> (i32, i32) {
    %c0_i32 = arith.constant 0 : i32
    %c0_i32_0 = arith.constant 0 : i32
    return %arg0, %c0_i32 : i32, i32
  }
  func.func @transform_15(%arg0: i32) -> (i32, i32) {
    %c0_i32 = arith.constant 0 : i32
    %c0_i32_0 = arith.constant 0 : i32
    return %arg0, %c0_i32 : i32, i32
  }
  func.func @transform_16(%arg0: i32) -> (i32, i32) {
    %c0_i32 = arith.constant 0 : i32
    %c0_i32_0 = arith.constant 0 : i32
    return %arg0, %c0_i32 : i32, i32
  }
  func.func @transform_17(%arg0: i32) -> (i32, i32) {
    %c0_i32 = arith.constant 0 : i32
    %c0_i32_0 = arith.constant 0 : i32
    return %arg0, %c0_i32 : i32, i32
  }
}

</mosaic_0001>

<llo_original>
// kernel: tpu_custom_call.1
$region0: #{tpu_custom_call.1}
  #allocation0 [shape = 'u32[]', space=smem, size = 0x4, offset = 0x4, fixed_abs, tag = 'smem constant byte address 0x4 - core index']
  #allocation1 [shape = 'u32[144,128]{1,0:T(1,128)}', space=vmem, size = 0x12000, scoped, tag = 'internal scratch']
  %s0 = inlined_call_operand.hbm [shape: bf16[8,32], index: 0, kind: input, shape index: {}]
  %s1 = inlined_call_operand.hbm [shape: bf16[8,32], index: 1, kind: input, shape index: {}]
  %s2 = inlined_call_operand.hbm [shape: f32[8,32], index: 2, kind: input, shape index: {}]
  %s3 = inlined_call_operand.hbm [shape: bf16[8,8,32], index: 3, kind: input, shape index: {}]
  %s4 = inlined_call_operand.hbm [shape: s32[8,8], index: 4, kind: input, shape index: {}]
  %s5 = inlined_call_operand.hbm [shape: bf16[32,32], index: 5, kind: input, shape index: {}]
  %s6 = inlined_call_operand.hbm [shape: bf16[32,32], index: 6, kind: input, shape index: {}]
  %s7 = inlined_call_operand.hbm [shape: f32[1,32], index: 7, kind: input, shape index: {}]
  %s8 = inlined_call_operand.hbm [shape: f32[1,32], index: 8, kind: input, shape index: {}]
  %s9 = inlined_call_operand.hbm [shape: bf16[32,128], index: 9, kind: input, shape index: {}]
  %s10 = inlined_call_operand.hbm [shape: bf16[32,128], index: 10, kind: input, shape index: {}]
  %s11 = inlined_call_operand.hbm [shape: bf16[32,128], index: 11, kind: input, shape index: {}]
  %s12 = inlined_call_operand.hbm [shape: f32[1,128], index: 12, kind: input, shape index: {}]
  %s13 = inlined_call_operand.hbm [shape: f32[8,32], index: 13, kind: output, shape index: {0}]
  %s14 = inlined_call_operand.hbm [shape: f32[8,32], index: 14, kind: output, shape index: {1}]
  %s15 = inlined_call_operand.hbm [shape: f32[8,8], index: 15, kind: output, shape index: {2}]
  %s16 = inlined_call_operand.hbm [shape: bf16[8,32], index: 16, kind: output, shape index: {3}]
  %s17 = inlined_call_operand.hbm [shape: bf16[8,32], index: 17, kind: output, shape index: {4}]
  %18 = xla_tuple %s13, %s14, %s15, %s16, %s17
  %s19 = sld [smem:[#allocation0]]
  $region146: #{tpu_custom_call.1} parent=0
    _
  %s21 = ssub.s32 1, %s19
  %s22 = scalar_select 0, %s21, %s19
  $region1: #{tpu_custom_call.1} parent=0
    #allocation2 [shape = 'u8[2048]{0}', space=vmem, size = 0x800, scoped, tag = 'input window, operand 0, single buffered']
    #allocation3 [shape = 's32[1]{0}', space=sflag, size = 0x4, scoped, tag = 'scoped memory for tpu_custom_call.1']
    #allocation4 [shape = 's32[1]{0}', space=sflag, size = 0x4, scoped, tag = 'scoped memory for tpu_custom_call.1']
    #allocation5 [shape = 'u8[2048]{0}', space=vmem, size = 0x800, scoped, tag = 'input window, operand 1, single buffered']
    #allocation6 [shape = 's32[1]{0}', space=sflag, size = 0x4, scoped, tag = 'scoped memory for tpu_custom_call.1']
    #allocation7 [shape = 'u8[4096]{0}', space=vmem, size = 0x1000, scoped, tag = 'input window, operand 2, single buffered']
    #allocation8 [shape = 'u8[16384]{0}', space=vmem, size = 0x4000, scoped, tag = 'input window, operand 3, single buffered']
    #allocation9 [shape = 's32[1]{0}', space=sflag, size = 0x4, scoped, tag = 'scoped memory for tpu_custom_call.1']
    #allocation10 [shape = 'u8[4096]{0}', space=vmem, size = 0x1000, scoped, tag = 'input window, operand 4, single buffered']
    #allocation11 [shape = 'u8[8192]{0}', space=vmem, size = 0x2000, scoped, tag = 'input window, operand 5, single buffered']
    #allocation12 [shape = 's32[1]{0}', space=sflag, size = 0x4, scoped, tag = 'scoped memory for tpu_custom_call.1']
    #allocation13 [shape = 'u8[8192]{0}', space=vmem, size = 0x2000, scoped, tag = 'input window, operand 6, single buffered']
    #allocation14 [shape = 'u8[512]{0}', space=vmem, size = 0x400, scoped, tag = 'input window, operand 7, single buffered']
    #allocation15 [shape = 's32[1]{0}', space=sflag, size = 0x4, scoped, tag = 'scoped memory for tpu_custom_call.1']
    #allocation16 [shape = 'u8[512]{0}', space=vmem, size = 0x400, scoped, tag = 'input window, operand 8, single buffered']
    #allocation17 [shape = 'u8[8192]{0}', space=vmem, size = 0x2000, scoped, tag = 'input window, operand 9, single buffered']
    #allocation18 [shape = 's32[1]{0}', space=sflag, size = 0x4, scoped, tag = 'scoped memory for tpu_custom_call.1']
    #allocation19 [shape = 'u8[8192]{0}', space=vmem, size = 0x2000, scoped, tag = 'input window, operand 10, single buffered']
    #allocation20 [shape = 'u8[8192]{0}', space=vmem, size = 0x2000, scoped, tag = 'input window, operand 11, single buffered']
    #allocation21 [shape = 's32[1]{0}', space=sflag, size = 0x4, scoped, tag = 'scoped memory for tpu_custom_call.1']
    #allocation22 [shape = 'u8[512]{0}', space=vmem, size = 0x400, scoped, tag = 'input window, operand 12, single buffered']
    #allocation23 [shape = 'u8[4096]{0}', space=vmem, size = 0x1000, scoped, tag = 'output window, operand 0, single buffered']
    #allocation24 [shape = 'u8[4096]{0}', space=vmem, size = 0x1000, scoped, tag = 'output window, operand 1, single buffered']
    #allocation25 [shape = 's32[1]{0}', space=sflag, size = 0x4, scoped, tag = 'scoped memory for tpu_custom_call.1']
    #allocation26 [shape = 'u8[4096]{0}', space=vmem, size = 0x1000, scoped, tag = 'output window, operand 2, single buffered']
    #allocation27 [shape = 'u8[2048]{0}', space=vmem, size = 0x800, scoped, tag = 'output window, operand 3, single buffered']
    #allocation28 [shape = 's32[1]{0}', space=sflag, size = 0x4, scoped, tag = 'scoped memory for tpu_custom_call.1']
    #allocation29 [shape = 'u8[2048]{0}', space=vmem, size = 0x800, scoped, tag = 'output window, operand 4, single buffered']
    %23 = vsyncpa [#allocation3], 0
    %24 = vsyncpa [#allocation6], 0
    %25 = vsyncpa [#allocation9], 0
    %26 = vsyncpa [#allocation12], 0
    %27 = vsyncpa [#allocation15], 0
    %28 = vsyncpa [#allocation18], 0
    %29 = vsyncpa [#allocation21], 0
    %30 = vsyncpa [#allocation4], 0
    %31 = vsyncpa [#allocation25], 0
    %32 = vsyncpa [#allocation28], 0
    // Predicated region
    $region2: #{tpu_custom_call.1} parent=1 // pred_check
      _
    $region3: #{tpu_custom_call.1} parent=1 // pred_check_branch
      %34 = sbr.rel (0) target = $region5
    $region4: #{tpu_custom_call.1} parent=1 // pred_region
      %s36 = ssub.s32 64, 64
      %37 = vsyncadd [#allocation3], %s36
      %s39 = sshll.u32 [#allocation2], 4
      %s40 = int_to_ptr.vmem [resolvable:$true] %s39
      %42 = dma.hbm_to_vmem [thread:$0]  %s0, 64, %s40, [#allocation3]
    $region5: #{tpu_custom_call.1} parent=1 // pred_fallthru
      _
    // Predicated region
    $region6: #{tpu_custom_call.1} parent=1 // pred_check
      _
    $region7: #{tpu_custom_call.1} parent=1 // pred_check_branch
      %44 = sbr.rel (0) target = $region9
    $region8: #{tpu_custom_call.1} parent=1 // pred_region
      %s46 = ssub.s32 64, 64
      %47 = vsyncadd [#allocation6], %s46
      %s49 = sshll.u32 [#allocation5], 4
      %s50 = int_to_ptr.vmem [resolvable:$true] %s49
      %52 = dma.hbm_to_vmem [thread:$0]  %s1, 64, %s50, [#allocation6]
    $region9: #{tpu_custom_call.1} parent=1 // pred_fallthru
      _
    // Predicated region
    $region10: #{tpu_custom_call.1} parent=1 // pred_check
      _
    $region11: #{tpu_custom_call.1} parent=1 // pred_check_branch
      %54 = sbr.rel (0) target = $region13
    $region12: #{tpu_custom_call.1} parent=1 // pred_region
      %s56 = ssub.s32 128, 128
      %57 = vsyncadd [#allocation6], %s56
      %s59 = sshll.u32 [#allocation7], 4
      %s60 = int_to_ptr.vmem [resolvable:$true] %s59
      %62 = dma.hbm_to_vmem [thread:$0]  %s2, 128, %s60, [#allocation6]
    $region13: #{tpu_custom_call.1} parent=1 // pred_fallthru
      _
    // Predicated region
    $region14: #{tpu_custom_call.1} parent=1 // pred_check
      _
    $region15: #{tpu_custom_call.1} parent=1 // pred_check_branch
      %64 = sbr.rel (0) target = $region17
    $region16: #{tpu_custom_call.1} parent=1 // pred_region
      %s66 = ssub.s32 512, 512
      %67 = vsyncadd [#allocation9], %s66
      %s68 = sshll.u32 [#allocation8], 4
      %s69 = int_to_ptr.vmem [resolvable:$true] %s68
      %74 = dma.hbm_to_vmem [thread:$0]  %s3, 512, %s69, [#allocation9], 64, 64, 4
    $region17: #{tpu_custom_call.1} parent=1 // pred_fallthru
      _
    // Predicated region
    $region18: #{tpu_custom_call.1} parent=1 // pred_check
      _
    $region19: #{tpu_custom_call.1} parent=1 // pred_check_branch
      %76 = sbr.rel (0) target = $region21
    $region20: #{tpu_custom_call.1} parent=1 // pred_region
      %s78 = ssub.s32 128, 128
      %79 = vsyncadd [#allocation9], %s78
      %s81 = sshll.u32 [#allocation10], 4
      %s82 = int_to_ptr.vmem [resolvable:$true] %s81
      %84 = dma.hbm_to_vmem [thread:$0]  %s4, 128, %s82, [#allocation9]
    $region21: #{tpu_custom_call.1} parent=1 // pred_fallthru
      _
    // Predicated region
    $region22: #{tpu_custom_call.1} parent=1 // pred_check
      _
    $region23: #{tpu_custom_call.1} parent=1 // pred_check_branch
      %86 = sbr.rel (0) target = $region25
    $region24: #{tpu_custom_call.1} parent=1 // pred_region
      %s88 = ssub.s32 256, 256
      %89 = vsyncadd [#allocation12], %s88
      %s90 = sshll.u32 [#allocation11], 4
      %s91 = int_to_ptr.vmem [resolvable:$true] %s90
      %96 = dma.hbm_to_vmem [thread:$0]  %s5, 256, %s91, [#allocation12], 64, 64, 4
    $region25: #{tpu_custom_call.1} parent=1 // pred_fallthru
      _
    // Predicated region
    $region26: #{tpu_custom_call.1} parent=1 // pred_check
      _
    $region27: #{tpu_custom_call.1} parent=1 // pred_check_branch
      %98 = sbr.rel (0) target = $region29
    $region28: #{tpu_custom_call.1} parent=1 // pred_region
      %s100 = ssub.s32 256, 256
      %101 = vsyncadd [#allocation12], %s100
      %s102 = sshll.u32 [#allocation13], 4
      %s103 = int_to_ptr.vmem [resolvable:$true] %s102
      %108 = dma.hbm_to_vmem [thread:$0]  %s6, 256, %s103, [#allocation12], 64, 64, 4
    $region29: #{tpu_custom_call.1} parent=1 // pred_fallthru
      _
    // Predicated region
    $region30: #{tpu_custom_call.1} parent=1 // pred_check
      _
    $region31: #{tpu_custom_call.1} parent=1 // pred_check_branch
      %110 = sbr.rel (0) target = $region33
    $region32: #{tpu_custom_call.1} parent=1 // pred_region
      %s112 = ssub.s32 16, 16
      %113 = vsyncadd [#allocation15], %s112
      %s115 = sshll.u32 [#allocation14], 4
      %s116 = int_to_ptr.vmem [resolvable:$true] %s115
      %118 = dma.hbm_to_vmem [thread:$0]  %s7, 16, %s116, [#allocation15]
    $region33: #{tpu_custom_call.1} parent=1 // pred_fallthru
      _
    // Predicated region
    $region34: #{tpu_custom_call.1} parent=1 // pred_check
      _
    $region35: #{tpu_custom_call.1} parent=1 // pred_check_branch
      %120 = sbr.rel (0) target = $region37
    $region36: #{tpu_custom_call.1} parent=1 // pred_region
      %s122 = ssub.s32 16, 16
      %123 = vsyncadd [#allocation15], %s122
      %s125 = sshll.u32 [#allocation16], 4
      %s126 = int_to_ptr.vmem [resolvable:$true] %s125
      %128 = dma.hbm_to_vmem [thread:$0]  %s8, 16, %s126, [#allocation15]
    $region37: #{tpu_custom_call.1} parent=1 // pred_fallthru
      _
    // Predicated region
    $region38: #{tpu_custom_call.1} parent=1 // pred_check
      _
    $region39: #{tpu_custom_call.1} parent=1 // pred_check_branch
      %130 = sbr.rel (0) target = $region41
    $region40: #{tpu_custom_call.1} parent=1 // pred_region
      %s132 = ssub.s32 256, 256
      %133 = vsyncadd [#allocation18], %s132
      %s134 = sshll.u32 [#allocation17], 4
      %s135 = int_to_ptr.vmem [resolvable:$true] %s134
      %140 = dma.hbm_to_vmem [thread:$0]  %s9, 256, %s135, [#allocation18], 64, 64, 4
    $region41: #{tpu_custom_call.1} parent=1 // pred_fallthru
      _
    // Predicated region
    $region42: #{tpu_custom_call.1} parent=1 // pred_check
      _
    $region43: #{tpu_custom_call.1} parent=1 // pred_check_branch
      %142 = sbr.rel (0) target = $region45
    $region44: #{tpu_custom_call.1} parent=1 // pred_region
      %s144 = ssub.s32 256, 256
      %145 = vsyncadd [#allocation18], %s144
      %s146 = sshll.u32 [#allocation19], 4
      %s147 = int_to_ptr.vmem [resolvable:$true] %s146
      %152 = dma.hbm_to_vmem [thread:$0]  %s10, 256, %s147, [#allocation18], 64, 64, 4
    $region45: #{tpu_custom_call.1} parent=1 // pred_fallthru
      _
    // Predicated region
    $region46: #{tpu_custom_call.1} parent=1 // pred_check
      _
    $region47: #{tpu_custom_call.1} parent=1 // pred_check_branch
      %154 = sbr.rel (0) target = $region49
    $region48: #{tpu_custom_call.1} parent=1 // pred_region
      %s156 = ssub.s32 256, 256
      %157 = vsyncadd [#allocation21], %s156
      %s158 = sshll.u32 [#allocation20], 4
      %s159 = int_to_ptr.vmem [resolvable:$true] %s158
      %164 = dma.hbm_to_vmem [thread:$0]  %s11, 256, %s159, [#allocation21], 64, 64, 4
    $region49: #{tpu_custom_call.1} parent=1 // pred_fallthru
      _
    // Predicated region
    $region50: #{tpu_custom_call.1} parent=1 // pred_check
      _
    $region51: #{tpu_custom_call.1} parent=1 // pred_check_branch
      %166 = sbr.rel (0) target = $region53
    $region52: #{tpu_custom_call.1} parent=1 // pred_region
      %s168 = ssub.s32 16, 16
      %169 = vsyncadd [#allocation21], %s168
      %s171 = sshll.u32 [#allocation22], 4
      %s172 = int_to_ptr.vmem [resolvable:$true] %s171
      %174 = dma.hbm_to_vmem [thread:$0]  %s12, 16, %s172, [#allocation21]
    $region53: #{tpu_custom_call.1} parent=1 // pred_fallthru
      _
    // Predicated region
    $region54: #{tpu_custom_call.1} parent=1 // pred_check
      _
    $region55: #{tpu_custom_call.1} parent=1 // pred_check_branch
      %176 = sbr.rel (0) target = $region57
    $region56: #{tpu_custom_call.1} parent=1 // pred_region
      %177 = dma.done [#allocation3], 64
    $region57: #{tpu_custom_call.1} parent=1 // pred_fallthru
      _
    // Predicated region
    $region58: #{tpu_custom_call.1} parent=1 // pred_check
      _
    $region59: #{tpu_custom_call.1} parent=1 // pred_check_branch
      %179 = sbr.rel (0) target = $region61
    $region60: #{tpu_custom_call.1} parent=1 // pred_region
      %180 = dma.done [#allocation6], 64
    $region61: #{tpu_custom_call.1} parent=1 // pred_fallthru
      _
    // Predicated region
    $region62: #{tpu_custom_call.1} parent=1 // pred_check
      _
    $region63: #{tpu_custom_call.1} parent=1 // pred_check_branch
      %182 = sbr.rel (0) target = $region65
    $region64: #{tpu_custom_call.1} parent=1 // pred_region
      %183 = dma.done [#allocation6], 128
    $region65: #{tpu_custom_call.1} parent=1 // pred_fallthru
      _
    // Predicated region
    $region66: #{tpu_custom_call.1} parent=1 // pred_check
      _
    $region67: #{tpu_custom_call.1} parent=1 // pred_check_branch
      %185 = sbr.rel (0) target = $region69
    $region68: #{tpu_custom_call.1} parent=1 // pred_region
      %186 = dma.done [#allocation9], 512
    $region69: #{tpu_custom_call.1} parent=1 // pred_fallthru
      _
    // Predicated region
    $region70: #{tpu_custom_call.1} parent=1 // pred_check
      _
    $region71: #{tpu_custom_call.1} parent=1 // pred_check_branch
      %188 = sbr.rel (0) target = $region73
    $region72: #{tpu_custom_call.1} parent=1 // pred_region
      %189 = dma.done [#allocation9], 128
    $region73: #{tpu_custom_call.1} parent=1 // pred_fallthru
      _
    // Predicated region
    $region74: #{tpu_custom_call.1} parent=1 // pred_check
      _
    $region75: #{tpu_custom_call.1} parent=1 // pred_check_branch
      %191 = sbr.rel (0) target = $region77
    $region76: #{tpu_custom_call.1} parent=1 // pred_region
      %192 = dma.done [#allocation12], 256
    $region77: #{tpu_custom_call.1} parent=1 // pred_fallthru
      _
    // Predicated region
    $region78: #{tpu_custom_call.1} parent=1 // pred_check
      _
    $region79: #{tpu_custom_call.1} parent=1 // pred_check_branch
      %194 = sbr.rel (0) target = $region81
    $region80: #{tpu_custom_call.1} parent=1 // pred_region
      %195 = dma.done [#allocation12], 256
    $region81: #{tpu_custom_call.1} parent=1 // pred_fallthru
      _
    // Predicated region
    $region82: #{tpu_custom_call.1} parent=1 // pred_check
      _
    $region83: #{tpu_custom_call.1} parent=1 // pred_check_branch
      %197 = sbr.rel (0) target = $region85
    $region84: #{tpu_custom_call.1} parent=1 // pred_region
      %198 = dma.done [#allocation15], 16
    $region85: #{tpu_custom_call.1} parent=1 // pred_fallthru
      _
    // Predicated region
    $region86: #{tpu_custom_call.1} parent=1 // pred_check
      _
    $region87: #{tpu_custom_call.1} parent=1 // pred_check_branch
      %200 = sbr.rel (0) target = $region89
    $region88: #{tpu_custom_call.1} parent=1 // pred_region
      %201 = dma.done [#allocation15], 16
    $region89: #{tpu_custom_call.1} parent=1 // pred_fallthru
      _
    // Predicated region
    $region90: #{tpu_custom_call.1} parent=1 // pred_check
      _
    $region91: #{tpu_custom_call.1} parent=1 // pred_check_branch
      %203 = sbr.rel (0) target = $region93
    $region92: #{tpu_custom_call.1} parent=1 // pred_region
      %204 = dma.done [#allocation18], 256
    $region93: #{tpu_custom_call.1} parent=1 // pred_fallthru
      _
    // Predicated region
    $region94: #{tpu_custom_call.1} parent=1 // pred_check
      _
    $region95: #{tpu_custom_call.1} parent=1 // pred_check_branch
      %206 = sbr.rel (0) target = $region97
    $region96: #{tpu_custom_call.1} parent=1 // pred_region
      %207 = dma.done [#allocation18], 256
    $region97: #{tpu_custom_call.1} parent=1 // pred_fallthru
      _
    // Predicated region
    $region98: #{tpu_custom_call.1} parent=1 // pred_check
      _
    $region99: #{tpu_custom_call.1} parent=1 // pred_check_branch
      %209 = sbr.rel (0) target = $region101
    $region100: #{tpu_custom_call.1} parent=1 // pred_region
      %210 = dma.done [#allocation21], 256
    $region101: #{tpu_custom_call.1} parent=1 // pred_fallthru
      _
    // Predicated region
    $region102: #{tpu_custom_call.1} parent=1 // pred_check
      _
    $region103: #{tpu_custom_call.1} parent=1 // pred_check_branch
      %212 = sbr.rel (0) target = $region105
    $region104: #{tpu_custom_call.1} parent=1 // pred_region
      %213 = dma.done [#allocation21], 16
    $region105: #{tpu_custom_call.1} parent=1 // pred_fallthru
      _
    %v215 = vld [vmem:[#allocation2] sm:$0xf]
    %v216 = vld [vmem:[#allocation5] sm:$0xf]
    %v217 = vld [vmem:[#allocation8] sm:$0xf]
    %v218 = vld [vmem:[#allocation8 + $0x4] sm:$0xf]
    %v219 = vld [vmem:[#allocation8 + $0x8] sm:$0xf]
    %v220 = vld [vmem:[#allocation8 + $0xc] sm:$0xf]
    %v221 = vld [vmem:[#allocation8 + $0x10] sm:$0xf]
    %v222 = vld [vmem:[#allocation8 + $0x14] sm:$0xf]
    %v223 = vld [vmem:[#allocation8 + $0x18] sm:$0xf]
    %v224 = vld [vmem:[#allocation8 + $0x1c] sm:$0xf]
    %v225 = vld [vmem:[#allocation11] sm:$0xf]
    %v226 = vld [vmem:[#allocation11 + $0x4] sm:$0xf]
    %v227 = vld [vmem:[#allocation11 + $0x8] sm:$0xf]
    %v228 = vld [vmem:[#allocation11 + $0xc] sm:$0xf]
    %v233 = vunpack.c.l.b16 %v225
    %v234 = vunpack.c.l.b16 %v226
    %v235 = vunpack.c.l.b16 %v227
    %v236 = vunpack.c.l.b16 %v228
    %v237 = vpack.c.b16 %v234, %v233
    %v238 = vpack.c.b16 %v236, %v235
    %vm241 = vcmask 261120
    %v243 = vsel %vm241, %v216, 0
    %245 = vmatprep.subr.bf16.mxu0 0
    %246 = vmatpush1.bf16.msra.mxu0 %v237
    %247 = vmatprep.subr.bf16.mxu0 0
    %248 = vmatpush1.bf16.msra.mxu0 %v238
    %249 = vmatprep.subr.bf16.mxu0 0
    %250 = vmatpush1.bf16.msra.mxu0 0
    %251 = vmatprep.subr.bf16.mxu0 0
    %252 = vmatpush1.bf16.msra.mxu0 0
    %253 = vmatprep.subr.bf16.mxu0 0
    %254 = vmatpush1.bf16.msra.mxu0 0
    %255 = vmatprep.subr.bf16.mxu0 0
    %256 = vmatpush1.bf16.msra.mxu0 0
    %257 = vmatprep.subr.bf16.mxu0 0
    %258 = vmatpush1.bf16.msra.mxu0 0
    %259 = vmatprep.subr.bf16.mxu0 0
    %260 = vmatpush1.bf16.msra.mxu0 0
    %261 = vmatprep.subr.bf16.mxu0 0
    %262 = vmatpush1.bf16.msra.mxu0 0
    %263 = vmatprep.subr.bf16.mxu0 0
    %264 = vmatpush1.bf16.msra.mxu0 0
    %265 = vmatprep.subr.bf16.mxu0 0
    %266 = vmatpush1.bf16.msra.mxu0 0
    %267 = vmatprep.subr.bf16.mxu0 0
    %268 = vmatpush1.bf16.msra.mxu0 0
    %269 = vmatprep.subr.bf16.mxu0 0
    %270 = vmatpush1.bf16.msra.mxu0 0
    %271 = vmatprep.subr.bf16.mxu0 0
    %272 = vmatpush1.bf16.msra.mxu0 0
    %273 = vmatprep.subr.bf16.mxu0 0
    %274 = vmatpush1.bf16.msra.mxu0 0
    %275 = vmatprep.subr.bf16.mxu0 0
    %276 = vmatpush1.bf16.msra.mxu0 0
    %277 = vmatprep.mubr.bf16.mxu0 0
    %278 = vmatmul.mubr.bf16.gmra.mrb[0].mxu0 %v243
    %v279 = vpop.f32.mrb[0].mxu0
    %v280 = vadd.f32 0.0, %v279
    %v281 = vpop.f32.mrb[0].mxu0
    %v282 = vpop.f32.mrb[0].mxu0
    %v283 = vpop.f32.mrb[0].mxu0
    %284 = vdwg.mxu0
    %v285 = vld [vmem:[#allocation13] sm:$0xf]
    %v286 = vld [vmem:[#allocation13 + $0x4] sm:$0xf]
    %v287 = vld [vmem:[#allocation13 + $0x8] sm:$0xf]
    %v288 = vld [vmem:[#allocation13 + $0xc] sm:$0xf]
    %v297 = vunpack.c.l.b16 %v217
    %v298 = vunpack.c.l.b16 %v218
    %v299 = vunpack.c.l.b16 %v219
    %v300 = vunpack.c.l.b16 %v220
    %v301 = vunpack.c.l.b16 %v221
    %v302 = vunpack.c.l.b16 %v222
    %v303 = vunpack.c.l.b16 %v223
    %v304 = vunpack.c.l.b16 %v224
    %v305 = vpack.c.b16 %v298, %v297
    %v306 = vpack.c.b16 %v300, %v299
    %v307 = vpack.c.b16 %v302, %v301
    %v308 = vpack.c.b16 %v304, %v303
    %v313 = vunpack.c.l.b16 %v285
    %v314 = vunpack.c.l.b16 %v286
    %v315 = vunpack.c.l.b16 %v287
    %v316 = vunpack.c.l.b16 %v288
    %v317 = vpack.c.b16 %v314, %v313
    %v318 = vpack.c.b16 %v316, %v315
    %v322 = vsel %vm241, %v305, 0
    %v325 = vsel %vm241, %v306, 0
    %v328 = vsel %vm241, %v307, 0
    %v331 = vsel %vm241, %v308, 0
    %333 = vmatprep.subr.bf16.mxu0 0
    %334 = vmatpush1.bf16.msra.mxu0 %v317
    %335 = vmatprep.subr.bf16.mxu0 0
    %336 = vmatpush1.bf16.msra.mxu0 %v318
    %337 = vmatprep.subr.bf16.mxu0 0
    %338 = vmatpush1.bf16.msra.mxu0 0
    %339 = vmatprep.subr.bf16.mxu0 0
    %340 = vmatpush1.bf16.msra.mxu0 0
    %341 = vmatprep.subr.bf16.mxu0 0
    %342 = vmatpush1.bf16.msra.mxu0 0
    %343 = vmatprep.subr.bf16.mxu0 0
    %344 = vmatpush1.bf16.msra.mxu0 0
    %345 = vmatprep.subr.bf16.mxu0 0
    %346 = vmatpush1.bf16.msra.mxu0 0
    %347 = vmatprep.subr.bf16.mxu0 0
    %348 = vmatpush1.bf16.msra.mxu0 0
    %349 = vmatprep.subr.bf16.mxu0 0
    %350 = vmatpush1.bf16.msra.mxu0 0
    %351 = vmatprep.subr.bf16.mxu0 0
    %352 = vmatpush1.bf16.msra.mxu0 0
    %353 = vmatprep.subr.bf16.mxu0 0
    %354 = vmatpush1.bf16.msra.mxu0 0
    %355 = vmatprep.subr.bf16.mxu0 0
    %356 = vmatpush1.bf16.msra.mxu0 0
    %357 = vmatprep.subr.bf16.mxu0 0
    %358 = vmatpush1.bf16.msra.mxu0 0
    %359 = vmatprep.subr.bf16.mxu0 0
    %360 = vmatpush1.bf16.msra.mxu0 0
    %361 = vmatprep.subr.bf16.mxu0 0
    %362 = vmatpush1.bf16.msra.mxu0 0
    %363 = vmatprep.subr.bf16.mxu0 0
    %364 = vmatpush1.bf16.msra.mxu0 0
    %365 = vmatprep.mubr.bf16.mxu0 0
    %366 = vmatmul.mubr.bf16.gmra.mrb[0].mxu0 %v322
    %v367 = vpop.f32.mrb[0].mxu0
    %v368 = vadd.f32 0.0, %v367
    %v369 = vpop.f32.mrb[0].mxu0
    %v370 = vpop.f32.mrb[0].mxu0
    %v371 = vadd.f32 0.0, %v370
    %v372 = vpop.f32.mrb[0].mxu0
    %373 = vmatprep.mubr.bf16.mxu0 0
    %374 = vmatmul.mubr.bf16.gmra.mrb[0].mxu0 %v325
    %v375 = vpop.f32.mrb[0].mxu0
    %v376 = vadd.f32 0.0, %v375
    %v377 = vpop.f32.mrb[0].mxu0
    %v378 = vpop.f32.mrb[0].mxu0
    %v379 = vadd.f32 0.0, %v378
    %v380 = vpop.f32.mrb[0].mxu0
    %381 = vmatprep.mubr.bf16.mxu0 0
    %382 = vmatmul.mubr.bf16.gmra.mrb[0].mxu0 %v328
    %v383 = vpop.f32.mrb[0].mxu0
    %v384 = vadd.f32 0.0, %v383
    %v385 = vpop.f32.mrb[0].mxu0
    %v386 = vpop.f32.mrb[0].mxu0
    %v387 = vadd.f32 0.0, %v386
    %v388 = vpop.f32.mrb[0].mxu0
    %389 = vmatprep.mubr.bf16.mxu0 0
    %390 = vmatmul.mubr.bf16.gmra.mrb[0].mxu0 %v331
    %v391 = vpop.f32.mrb[0].mxu0
    %v392 = vadd.f32 0.0, %v391
    %v393 = vpop.f32.mrb[0].mxu0
    %v394 = vpop.f32.mrb[0].mxu0
    %v395 = vadd.f32 0.0, %v394
    %v396 = vpop.f32.mrb[0].mxu0
    %397 = vdwg.mxu0
    %v399 = vcombine.high %v280, %v280
    %v401 = vunpack.c.l.s4 1966171168
    %v402 = vunpack.c.0.s8 %v401
    %v403 = vlaneseq
    %v404 = vshrl.u32 %v403, 7
    %v405 = vsub.s32 %v402, %v404
    %v406 = vrot.slane %v280, %v405
    %v408 = vunpack.c.l.s4 1966171168
    %v409 = vunpack.c.0.s8 %v408
    %v410 = vlaneseq
    %v411 = vshrl.u32 %v410, 7
    %v412 = vsub.s32 %v409, %v411
    %v413 = vrot.slane %v399, %v412
    %v414 = vcombine.high %v406, %v406
    %v415 = vcombine.high %v413, %v413
    %v417 = vunpack.c.l.s4 1966171168
    %v418 = vunpack.c.0.s8 %v417
    %v419 = vlaneseq
    %v420 = vshrl.u32 %v419, 7
    %v421 = vsub.s32 %v418, %v420
    %v422 = vrot.slane %v406, %v421
    %v424 = vunpack.c.l.s4 1966171168
    %v425 = vunpack.c.0.s8 %v424
    %v426 = vlaneseq
    %v427 = vshrl.u32 %v426, 7
    %v428 = vsub.s32 %v425, %v427
    %v429 = vrot.slane %v413, %v428
    %v431 = vunpack.c.l.s4 1966171168
    %v432 = vunpack.c.0.s8 %v431
    %v433 = vlaneseq
    %v434 = vshrl.u32 %v433, 7
    %v435 = vsub.s32 %v432, %v434
    %v436 = vrot.slane %v414, %v435
    %v438 = vunpack.c.l.s4 1966171168
    %v439 = vunpack.c.0.s8 %v438
    %v440 = vlaneseq
    %v441 = vshrl.u32 %v440, 7
    %v442 = vsub.s32 %v439, %v441
    %v443 = vrot.slane %v415, %v442
    %v444 = vcombine.high %v422, %v422
    %v445 = vcombine.high %v429, %v429
    %v446 = vcombine.high %v436, %v436
    %v447 = vcombine.high %v443, %v443
    %v448 = vlaneseq
    %v449 = vshrl.u32 %v448, 7
    %v450 = vsub.s32 0, %v449
    %v451 = vrot.slane %v422, %v450
    %v452 = vlaneseq
    %v453 = vshrl.u32 %v452, 7
    %v454 = vsub.s32 0, %v453
    %v455 = vrot.slane %v436, %v454
    %v456 = vlaneseq
    %v457 = vshrl.u32 %v456, 7
    %v458 = vsub.s32 0, %v457
    %v459 = vrot.slane %v444, %v458
    %v460 = vlaneseq
    %v461 = vshrl.u32 %v460, 7
    %v462 = vsub.s32 0, %v461
    %v463 = vrot.slane %v446, %v462
    %v464 = vlaneseq
    %v465 = vshrl.u32 %v464, 7
    %v466 = vsub.s32 0, %v465
    %v467 = vrot.slane %v429, %v466
    %v468 = vlaneseq
    %v469 = vshrl.u32 %v468, 7
    %v470 = vsub.s32 0, %v469
    %v471 = vrot.slane %v443, %v470
    %v472 = vlaneseq
    %v473 = vshrl.u32 %v472, 7
    %v474 = vsub.s32 0, %v473
    %v475 = vrot.slane %v445, %v474
    %v476 = vlaneseq
    %v477 = vshrl.u32 %v476, 7
    %v478 = vsub.s32 0, %v477
    %v479 = vrot.slane %v447, %v478
    %v488 = vadd.f32 %v368, %v451
    %v489 = vadd.f32 %v371, %v455
    %v490 = vadd.f32 %v376, %v459
    %v491 = vadd.f32 %v379, %v463
    %v492 = vadd.f32 %v384, %v467
    %v493 = vadd.f32 %v387, %v471
    %v494 = vadd.f32 %v392, %v475
    %v495 = vadd.f32 %v395, %v479
    %v496 = vld [vmem:[#allocation14] sm:$0x1]
    %v498 = vlaneseq
    %v499 = vshrl.u32 %v498, 7
    %v500 = vsub.s32 0, %v499
    %v501 = vrot.slane %v496, %v500
    %v503 = vadd.f32 %v488, %v501
    %v504 = vadd.f32 %v489, %v501
    %v505 = vadd.f32 %v490, %v501
    %v506 = vadd.f32 %v491, %v501
    %v507 = vadd.f32 %v492, %v501
    %v508 = vadd.f32 %v493, %v501
    %v509 = vadd.f32 %v494, %v501
    %v510 = vadd.f32 %v495, %v501
    %v511 = vtanh.pop %v503
    %v512 = vtanh.pop %v504
    %v513 = vtanh.pop %v505
    %v514 = vtanh.pop %v506
    %v515 = vtanh.pop %v507
    %v516 = vtanh.pop %v508
    %v517 = vtanh.pop %v509
    %v518 = vtanh.pop %v510
    %v519 = vld [vmem:[#allocation16] sm:$0x1]
    %v521 = vlaneseq
    %v522 = vshrl.u32 %v521, 7
    %v523 = vsub.s32 0, %v522
    %v524 = vrot.slane %v519, %v523
    %v526 = vmul.f32 %v511, %v524
    %v527 = vmul.f32 %v512, %v524
    %v528 = vmul.f32 %v513, %v524
    %v529 = vmul.f32 %v514, %v524
    %v530 = vmul.f32 %v515, %v524
    %v531 = vmul.f32 %v516, %v524
    %v532 = vmul.f32 %v517, %v524
    %v533 = vmul.f32 %v518, %v524
    %v534 = vsel %vm241, %v526, 0.0
    %535 = vadd.xlane.f32.xlu0 %v534
    %v536 = vpop.xlane.xlu0 %535
    %v537 = vsel %vm241, %v527, 0.0
    %538 = vadd.xlane.f32.xlu0 %v537
    %v539 = vpop.xlane.xlu0 %538
    %v540 = vsel %vm241, %v528, 0.0
    %541 = vadd.xlane.f32.xlu0 %v540
    %v542 = vpop.xlane.xlu0 %541
    %v543 = vsel %vm241, %v529, 0.0
    %544 = vadd.xlane.f32.xlu0 %v543
    %v545 = vpop.xlane.xlu0 %544
    %v546 = vsel %vm241, %v530, 0.0
    %547 = vadd.xlane.f32.xlu0 %v546
    %v548 = vpop.xlane.xlu0 %547
    %v549 = vsel %vm241, %v531, 0.0
    %550 = vadd.xlane.f32.xlu0 %v549
    %v551 = vpop.xlane.xlu0 %550
    %v552 = vsel %vm241, %v532, 0.0
    %553 = vadd.xlane.f32.xlu0 %v552
    %v554 = vpop.xlane.xlu0 %553
    %v555 = vsel %vm241, %v533, 0.0
    %556 = vadd.xlane.f32.xlu0 %v555
    %v557 = vpop.xlane.xlu0 %556
    %v558 = vld [vmem:[#allocation10] sm:$0xff]
    %vm559 = vcmp.gt.s32.totalorder %v558, 0
    %v568 = vlaneseq
    %v569 = vand.u32 %v568, 127
    %v570 = vlaneseq
    %v571 = vshrl.u32 %v570, 7
    %v572 = vsub.s32 %v569, %v571
    %v573 = vrot.slane %v536, %v572
    %v574 = vlaneseq
    %v575 = vshrl.u32 %v574, 7
    %v576 = vsub.s32 %v569, %v575
    %v577 = vrot.slane %v539, %v576
    %v578 = vlaneseq
    %v579 = vshrl.u32 %v578, 7
    %v580 = vsub.s32 %v569, %v579
    %v581 = vrot.slane %v542, %v580
    %v582 = vlaneseq
    %v583 = vshrl.u32 %v582, 7
    %v584 = vsub.s32 %v569, %v583
    %v585 = vrot.slane %v545, %v584
    %v586 = vlaneseq
    %v587 = vshrl.u32 %v586, 7
    %v588 = vsub.s32 %v569, %v587
    %v589 = vrot.slane %v548, %v588
    %v590 = vlaneseq
    %v591 = vshrl.u32 %v590, 7
    %v592 = vsub.s32 %v569, %v591
    %v593 = vrot.slane %v551, %v592
    %v594 = vlaneseq
    %v595 = vshrl.u32 %v594, 7
    %v596 = vsub.s32 %v569, %v595
    %v597 = vrot.slane %v554, %v596
    %v598 = vlaneseq
    %v599 = vshrl.u32 %v598, 7
    %v600 = vsub.s32 %v569, %v599
    %v601 = vrot.slane %v557, %v600
    %vm602 = vcmask 1041409
    %v603 = vsel %vm602, %v577, %v573
    %vm604 = vcmask 1042434
    %v605 = vsel %vm604, %v581, %v603
    %vm606 = vcmask 1043459
    %v607 = vsel %vm606, %v585, %v605
    %vm608 = vcmask 1044484
    %v609 = vsel %vm608, %v589, %v607
    %vm610 = vcmask 1045509
    %v611 = vsel %vm610, %v593, %v609
    %vm612 = vcmask 1046534
    %v613 = vsel %vm612, %v597, %v611
    %vm614 = vcmask 1047559
    %v615 = vsel %vm614, %v601, %v613
    %v617 = vsel %vm559, %v615, -1e+09
    %vm618 = vcmask 64512
    %v619 = vsel %vm618, %v617, -inf
    %620 = vmax.xlane.f32.xlu0 %v619
    %v621 = vpop.xlane.xlu0 %620
    %v622 = vsub.f32 %v617, %v621
    %v623 = vmul.f32 %v622, 1.442695
    %v624 = vpow.pop %v623
    %v625 = vsel %vm618, %v624, 0.0
    %626 = vadd.xlane.f32.xlu0 %v625
    %v627 = vpop.xlane.xlu0 %626
    %v628 = vrcp.pop %v627
    %v629 = vmul.f32 %v624, %v628
    %v630 = vpack.c.bf16 %v629, %v629
    %v633 = vunpack.c.l.s4 1966171168
    %v634 = vunpack.c.0.s8 %v633
    %v635 = vlaneseq
    %v636 = vshrl.u32 %v635, 7
    %v637 = vsub.s32 %v634, %v636
    %v638 = vrot.slane %v630, %v637
    %v639 = vcombine.high %v638, %v638
    %v641 = vunpack.c.l.s4 1966171168
    %v642 = vunpack.c.0.s8 %v641
    %v643 = vlaneseq
    %v644 = vshrl.u32 %v643, 7
    %v645 = vsub.s32 %v642, %v644
    %v646 = vrot.slane %v638, %v645
    %v648 = vunpack.c.l.s4 1966171168
    %v649 = vunpack.c.0.s8 %v648
    %v650 = vlaneseq
    %v651 = vshrl.u32 %v650, 7
    %v652 = vsub.s32 %v649, %v651
    %v653 = vrot.slane %v639, %v652
    %v654 = vcombine.high %v646, %v646
    %v655 = vcombine.high %v653, %v653
    %v656 = vunpack.i.l.s16 %v646
    %v657 = vunpack.i.h.s16 %v646
    %v658 = vunpack.i.l.s16 %v653
    %v659 = vunpack.i.h.s16 %v653
    %v660 = vunpack.i.l.s16 %v654
    %v661 = vunpack.i.h.s16 %v654
    %v662 = vunpack.i.l.s16 %v655
    %v663 = vunpack.i.h.s16 %v655
    %v664 = vpack.i.b16 %v656, %v656
    %v665 = vlaneseq
    %v666 = vshrl.u32 %v665, 7
    %v667 = vsub.s32 0, %v666
    %v668 = vrot.slane %v664, %v667
    %v670 = vsel %vm618, %v668, 0
    %vm672 = vcmask 1043456
    %v674 = vsel %vm672, %v217, 0
    %676 = vmatprep.subr.bf16.mxu0 0
    %677 = vmatpush1.bf16.msra.mxu0 %v674
    %678 = vmatprep.subr.bf16.mxu0 0
    %679 = vmatpush1.bf16.msra.mxu0 0
    %680 = vmatprep.subr.bf16.mxu0 0
    %681 = vmatpush1.bf16.msra.mxu0 0
    %682 = vmatprep.subr.bf16.mxu0 0
    %683 = vmatpush1.bf16.msra.mxu0 0
    %684 = vmatprep.subr.bf16.mxu0 0
    %685 = vmatpush1.bf16.msra.mxu0 0
    %686 = vmatprep.subr.bf16.mxu0 0
    %687 = vmatpush1.bf16.msra.mxu0 0
    %688 = vmatprep.subr.bf16.mxu0 0
    %689 = vmatpush1.bf16.msra.mxu0 0
    %690 = vmatprep.subr.bf16.mxu0 0
    %691 = vmatpush1.bf16.msra.mxu0 0
    %692 = vmatprep.subr.bf16.mxu0 0
    %693 = vmatpush1.bf16.msra.mxu0 0
    %694 = vmatprep.subr.bf16.mxu0 0
    %695 = vmatpush1.bf16.msra.mxu0 0
    %696 = vmatprep.subr.bf16.mxu0 0
    %697 = vmatpush1.bf16.msra.mxu0 0
    %698 = vmatprep.subr.bf16.mxu0 0
    %699 = vmatpush1.bf16.msra.mxu0 0
    %700 = vmatprep.subr.bf16.mxu0 0
    %701 = vmatpush1.bf16.msra.mxu0 0
    %702 = vmatprep.subr.bf16.mxu0 0
    %703 = vmatpush1.bf16.msra.mxu0 0
    %704 = vmatprep.subr.bf16.mxu0 0
    %705 = vmatpush1.bf16.msra.mxu0 0
    %706 = vmatprep.subr.bf16.mxu0 0
    %707 = vmatpush1.bf16.msra.mxu0 0
    %708 = vmatprep.mubr.bf16.mxu0 0
    %709 = vmatmul.mubr.bf16.gmra.mrb[0].mxu0 %v670
    %v710 = vpop.f32.mrb[0].mxu0
    %v711 = vadd.f32 0.0, %v710
    %v712 = vpop.f32.mrb[0].mxu0
    %v713 = vpop.f32.mrb[0].mxu0
    %v714 = vpop.f32.mrb[0].mxu0
    %715 = vdwg.mxu0
    %v716 = vpack.i.b16 %v657, %v657
    %v717 = vlaneseq
    %v718 = vshrl.u32 %v717, 7
    %v719 = vsub.s32 0, %v718
    %v720 = vrot.slane %v716, %v719
    %v722 = vsel %vm618, %v720, 0
    %v725 = vsel %vm672, %v218, 0
    %727 = vmatprep.subr.bf16.mxu0 0
    %728 = vmatpush1.bf16.msra.mxu0 %v725
    %729 = vmatprep.subr.bf16.mxu0 0
    %730 = vmatpush1.bf16.msra.mxu0 0
    %731 = vmatprep.subr.bf16.mxu0 0
    %732 = vmatpush1.bf16.msra.mxu0 0
    %733 = vmatprep.subr.bf16.mxu0 0
    %734 = vmatpush1.bf16.msra.mxu0 0
    %735 = vmatprep.subr.bf16.mxu0 0
    %736 = vmatpush1.bf16.msra.mxu0 0
    %737 = vmatprep.subr.bf16.mxu0 0
    %738 = vmatpush1.bf16.msra.mxu0 0
    %739 = vmatprep.subr.bf16.mxu0 0
    %740 = vmatpush1.bf16.msra.mxu0 0
    %741 = vmatprep.subr.bf16.mxu0 0
    %742 = vmatpush1.bf16.msra.mxu0 0
    %743 = vmatprep.subr.bf16.mxu0 0
    %744 = vmatpush1.bf16.msra.mxu0 0
    %745 = vmatprep.subr.bf16.mxu0 0
    %746 = vmatpush1.bf16.msra.mxu0 0
    %747 = vmatprep.subr.bf16.mxu0 0
    %748 = vmatpush1.bf16.msra.mxu0 0
    %749 = vmatprep.subr.bf16.mxu0 0
    %750 = vmatpush1.bf16.msra.mxu0 0
    %751 = vmatprep.subr.bf16.mxu0 0
    %752 = vmatpush1.bf16.msra.mxu0 0
    %753 = vmatprep.subr.bf16.mxu0 0
    %754 = vmatpush1.bf16.msra.mxu0 0
    %755 = vmatprep.subr.bf16.mxu0 0
    %756 = vmatpush1.bf16.msra.mxu0 0
    %757 = vmatprep.subr.bf16.mxu0 0
    %758 = vmatpush1.bf16.msra.mxu0 0
    %759 = vmatprep.mubr.bf16.mxu0 0
    %760 = vmatmul.mubr.bf16.gmra.mrb[0].mxu0 %v722
    %v761 = vpop.f32.mrb[0].mxu0
    %v762 = vadd.f32 0.0, %v761
    %v763 = vpop.f32.mrb[0].mxu0
    %v764 = vpop.f32.mrb[0].mxu0
    %v765 = vpop.f32.mrb[0].mxu0
    %766 = vdwg.mxu0
    %v767 = vpack.i.b16 %v658, %v658
    %v768 = vlaneseq
    %v769 = vshrl.u32 %v768, 7
    %v770 = vsub.s32 0, %v769
    %v771 = vrot.slane %v767, %v770
    %v773 = vsel %vm618, %v771, 0
    %v776 = vsel %vm672, %v219, 0
    %778 = vmatprep.subr.bf16.mxu0 0
    %779 = vmatpush1.bf16.msra.mxu0 %v776
    %780 = vmatprep.subr.bf16.mxu0 0
    %781 = vmatpush1.bf16.msra.mxu0 0
    %782 = vmatprep.subr.bf16.mxu0 0
    %783 = vmatpush1.bf16.msra.mxu0 0
    %784 = vmatprep.subr.bf16.mxu0 0
    %785 = vmatpush1.bf16.msra.mxu0 0
    %786 = vmatprep.subr.bf16.mxu0 0
    %787 = vmatpush1.bf16.msra.mxu0 0
    %788 = vmatprep.subr.bf16.mxu0 0
    %789 = vmatpush1.bf16.msra.mxu0 0
    %790 = vmatprep.subr.bf16.mxu0 0
    %791 = vmatpush1.bf16.msra.mxu0 0
    %792 = vmatprep.subr.bf16.mxu0 0
    %793 = vmatpush1.bf16.msra.mxu0 0
    %794 = vmatprep.subr.bf16.mxu0 0
    %795 = vmatpush1.bf16.msra.mxu0 0
    %796 = vmatprep.subr.bf16.mxu0 0
    %797 = vmatpush1.bf16.msra.mxu0 0
    %798 = vmatprep.subr.bf16.mxu0 0
    %799 = vmatpush1.bf16.msra.mxu0 0
    %800 = vmatprep.subr.bf16.mxu0 0
    %801 = vmatpush1.bf16.msra.mxu0 0
    %802 = vmatprep.subr.bf16.mxu0 0
    %803 = vmatpush1.bf16.msra.mxu0 0
    %804 = vmatprep.subr.bf16.mxu0 0
    %805 = vmatpush1.bf16.msra.mxu0 0
    %806 = vmatprep.subr.bf16.mxu0 0
    %807 = vmatpush1.bf16.msra.mxu0 0
    %808 = vmatprep.subr.bf16.mxu0 0
    %809 = vmatpush1.bf16.msra.mxu0 0
    %810 = vmatprep.mubr.bf16.mxu0 0
    %811 = vmatmul.mubr.bf16.gmra.mrb[0].mxu0 %v773
    %v812 = vpop.f32.mrb[0].mxu0
    %v813 = vadd.f32 0.0, %v812
    %v814 = vpop.f32.mrb[0].mxu0
    %v815 = vpop.f32.mrb[0].mxu0
    %v816 = vpop.f32.mrb[0].mxu0
    %817 = vdwg.mxu0
    %v818 = vpack.i.b16 %v659, %v659
    %v819 = vlaneseq
    %v820 = vshrl.u32 %v819, 7
    %v821 = vsub.s32 0, %v820
    %v822 = vrot.slane %v818, %v821
    %v824 = vsel %vm618, %v822, 0
    %v827 = vsel %vm672, %v220, 0
    %829 = vmatprep.subr.bf16.mxu0 0
    %830 = vmatpush1.bf16.msra.mxu0 %v827
    %831 = vmatprep.subr.bf16.mxu0 0
    %832 = vmatpush1.bf16.msra.mxu0 0
    %833 = vmatprep.subr.bf16.mxu0 0
    %834 = vmatpush1.bf16.msra.mxu0 0
    %835 = vmatprep.subr.bf16.mxu0 0
    %836 = vmatpush1.bf16.msra.mxu0 0
    %837 = vmatprep.subr.bf16.mxu0 0
    %838 = vmatpush1.bf16.msra.mxu0 0
    %839 = vmatprep.subr.bf16.mxu0 0
    %840 = vmatpush1.bf16.msra.mxu0 0
    %841 = vmatprep.subr.bf16.mxu0 0
    %842 = vmatpush1.bf16.msra.mxu0 0
    %843 = vmatprep.subr.bf16.mxu0 0
    %844 = vmatpush1.bf16.msra.mxu0 0
    %845 = vmatprep.subr.bf16.mxu0 0
    %846 = vmatpush1.bf16.msra.mxu0 0
    %847 = vmatprep.subr.bf16.mxu0 0
    %848 = vmatpush1.bf16.msra.mxu0 0
    %849 = vmatprep.subr.bf16.mxu0 0
    %850 = vmatpush1.bf16.msra.mxu0 0
    %851 = vmatprep.subr.bf16.mxu0 0
    %852 = vmatpush1.bf16.msra.mxu0 0
    %853 = vmatprep.subr.bf16.mxu0 0
    %854 = vmatpush1.bf16.msra.mxu0 0
    %855 = vmatprep.subr.bf16.mxu0 0
    %856 = vmatpush1.bf16.msra.mxu0 0
    %857 = vmatprep.subr.bf16.mxu0 0
    %858 = vmatpush1.bf16.msra.mxu0 0
    %859 = vmatprep.subr.bf16.mxu0 0
    %860 = vmatpush1.bf16.msra.mxu0 0
    %861 = vmatprep.mubr.bf16.mxu0 0
    %862 = vmatmul.mubr.bf16.gmra.mrb[0].mxu0 %v824
    %v863 = vpop.f32.mrb[0].mxu0
    %v864 = vadd.f32 0.0, %v863
    %v865 = vpop.f32.mrb[0].mxu0
    %v866 = vpop.f32.mrb[0].mxu0
    %v867 = vpop.f32.mrb[0].mxu0
    %868 = vdwg.mxu0
    %v869 = vpack.i.b16 %v660, %v660
    %v870 = vlaneseq
    %v871 = vshrl.u32 %v870, 7
    %v872 = vsub.s32 0, %v871
    %v873 = vrot.slane %v869, %v872
    %v875 = vsel %vm618, %v873, 0
    %v878 = vsel %vm672, %v221, 0
    %880 = vmatprep.subr.bf16.mxu0 0
    %881 = vmatpush1.bf16.msra.mxu0 %v878
    %882 = vmatprep.subr.bf16.mxu0 0
    %883 = vmatpush1.bf16.msra.mxu0 0
    %884 = vmatprep.subr.bf16.mxu0 0
    %885 = vmatpush1.bf16.msra.mxu0 0
    %886 = vmatprep.subr.bf16.mxu0 0
    %887 = vmatpush1.bf16.msra.mxu0 0
    %888 = vmatprep.subr.bf16.mxu0 0
    %889 = vmatpush1.bf16.msra.mxu0 0
    %890 = vmatprep.subr.bf16.mxu0 0
    %891 = vmatpush1.bf16.msra.mxu0 0
    %892 = vmatprep.subr.bf16.mxu0 0
    %893 = vmatpush1.bf16.msra.mxu0 0
    %894 = vmatprep.subr.bf16.mxu0 0
    %895 = vmatpush1.bf16.msra.mxu0 0
    %896 = vmatprep.subr.bf16.mxu0 0
    %897 = vmatpush1.bf16.msra.mxu0 0
    %898 = vmatprep.subr.bf16.mxu0 0
    %899 = vmatpush1.bf16.msra.mxu0 0
    %900 = vmatprep.subr.bf16.mxu0 0
    %901 = vmatpush1.bf16.msra.mxu0 0
    %902 = vmatprep.subr.bf16.mxu0 0
    %903 = vmatpush1.bf16.msra.mxu0 0
    %904 = vmatprep.subr.bf16.mxu0 0
    %905 = vmatpush1.bf16.msra.mxu0 0
    %906 = vmatprep.subr.bf16.mxu0 0
    %907 = vmatpush1.bf16.msra.mxu0 0
    %908 = vmatprep.subr.bf16.mxu0 0
    %909 = vmatpush1.bf16.msra.mxu0 0
    %910 = vmatprep.subr.bf16.mxu0 0
    %911 = vmatpush1.bf16.msra.mxu0 0
    %912 = vmatprep.mubr.bf16.mxu0 0
    %913 = vmatmul.mubr.bf16.gmra.mrb[0].mxu0 %v875
    %v914 = vpop.f32.mrb[0].mxu0
    %v915 = vadd.f32 0.0, %v914
    %v916 = vpop.f32.mrb[0].mxu0
    %v917 = vpop.f32.mrb[0].mxu0
    %v918 = vpop.f32.mrb[0].mxu0
    %919 = vdwg.mxu0
    %v920 = vpack.i.b16 %v661, %v661
    %v921 = vlaneseq
    %v922 = vshrl.u32 %v921, 7
    %v923 = vsub.s32 0, %v922
    %v924 = vrot.slane %v920, %v923
    %v926 = vsel %vm618, %v924, 0
    %v929 = vsel %vm672, %v222, 0
    %931 = vmatprep.subr.bf16.mxu0 0
    %932 = vmatpush1.bf16.msra.mxu0 %v929
    %933 = vmatprep.subr.bf16.mxu0 0
    %934 = vmatpush1.bf16.msra.mxu0 0
    %935 = vmatprep.subr.bf16.mxu0 0
    %936 = vmatpush1.bf16.msra.mxu0 0
    %937 = vmatprep.subr.bf16.mxu0 0
    %938 = vmatpush1.bf16.msra.mxu0 0
    %939 = vmatprep.subr.bf16.mxu0 0
    %940 = vmatpush1.bf16.msra.mxu0 0
    %941 = vmatprep.subr.bf16.mxu0 0
    %942 = vmatpush1.bf16.msra.mxu0 0
    %943 = vmatprep.subr.bf16.mxu0 0
    %944 = vmatpush1.bf16.msra.mxu0 0
    %945 = vmatprep.subr.bf16.mxu0 0
    %946 = vmatpush1.bf16.msra.mxu0 0
    %947 = vmatprep.subr.bf16.mxu0 0
    %948 = vmatpush1.bf16.msra.mxu0 0
    %949 = vmatprep.subr.bf16.mxu0 0
    %950 = vmatpush1.bf16.msra.mxu0 0
    %951 = vmatprep.subr.bf16.mxu0 0
    %952 = vmatpush1.bf16.msra.mxu0 0
    %953 = vmatprep.subr.bf16.mxu0 0
    %954 = vmatpush1.bf16.msra.mxu0 0
    %955 = vmatprep.subr.bf16.mxu0 0
    %956 = vmatpush1.bf16.msra.mxu0 0
    %957 = vmatprep.subr.bf16.mxu0 0
    %958 = vmatpush1.bf16.msra.mxu0 0
    %959 = vmatprep.subr.bf16.mxu0 0
    %960 = vmatpush1.bf16.msra.mxu0 0
    %961 = vmatprep.subr.bf16.mxu0 0
    %962 = vmatpush1.bf16.msra.mxu0 0
    %963 = vmatprep.mubr.bf16.mxu0 0
    %964 = vmatmul.mubr.bf16.gmra.mrb[0].mxu0 %v926
    %v965 = vpop.f32.mrb[0].mxu0
    %v966 = vadd.f32 0.0, %v965
    %v967 = vpop.f32.mrb[0].mxu0
    %v968 = vpop.f32.mrb[0].mxu0
    %v969 = vpop.f32.mrb[0].mxu0
    %970 = vdwg.mxu0
    %v971 = vpack.i.b16 %v662, %v662
    %v972 = vlaneseq
    %v973 = vshrl.u32 %v972, 7
    %v974 = vsub.s32 0, %v973
    %v975 = vrot.slane %v971, %v974
    %v977 = vsel %vm618, %v975, 0
    %v980 = vsel %vm672, %v223, 0
    %982 = vmatprep.subr.bf16.mxu0 0
    %983 = vmatpush1.bf16.msra.mxu0 %v980
    %984 = vmatprep.subr.bf16.mxu0 0
    %985 = vmatpush1.bf16.msra.mxu0 0
    %986 = vmatprep.subr.bf16.mxu0 0
    %987 = vmatpush1.bf16.msra.mxu0 0
    %988 = vmatprep.subr.bf16.mxu0 0
    %989 = vmatpush1.bf16.msra.mxu0 0
    %990 = vmatprep.subr.bf16.mxu0 0
    %991 = vmatpush1.bf16.msra.mxu0 0
    %992 = vmatprep.subr.bf16.mxu0 0
    %993 = vmatpush1.bf16.msra.mxu0 0
    %994 = vmatprep.subr.bf16.mxu0 0
    %995 = vmatpush1.bf16.msra.mxu0 0
    %996 = vmatprep.subr.bf16.mxu0 0
    %997 = vmatpush1.bf16.msra.mxu0 0
    %998 = vmatprep.subr.bf16.mxu0 0
    %999 = vmatpush1.bf16.msra.mxu0 0
    %1000 = vmatprep.subr.bf16.mxu0 0
    %1001 = vmatpush1.bf16.msra.mxu0 0
    %1002 = vmatprep.subr.bf16.mxu0 0
    %1003 = vmatpush1.bf16.msra.mxu0 0
    %1004 = vmatprep.subr.bf16.mxu0 0
    %1005 = vmatpush1.bf16.msra.mxu0 0
    %1006 = vmatprep.subr.bf16.mxu0 0
    %1007 = vmatpush1.bf16.msra.mxu0 0
    %1008 = vmatprep.subr.bf16.mxu0 0
    %1009 = vmatpush1.bf16.msra.mxu0 0
    %1010 = vmatprep.subr.bf16.mxu0 0
    %1011 = vmatpush1.bf16.msra.mxu0 0
    %1012 = vmatprep.subr.bf16.mxu0 0
    %1013 = vmatpush1.bf16.msra.mxu0 0
    %1014 = vmatprep.mubr.bf16.mxu0 0
    %1015 = vmatmul.mubr.bf16.gmra.mrb[0].mxu0 %v977
    %v1016 = vpop.f32.mrb[0].mxu0
    %v1017 = vadd.f32 0.0, %v1016
    %v1018 = vpop.f32.mrb[0].mxu0
    %v1019 = vpop.f32.mrb[0].mxu0
    %v1020 = vpop.f32.mrb[0].mxu0
    %1021 = vdwg.mxu0
    %v1022 = vpack.i.b16 %v663, %v663
    %v1023 = vlaneseq
    %v1024 = vshrl.u32 %v1023, 7
    %v1025 = vsub.s32 0, %v1024
    %v1026 = vrot.slane %v1022, %v1025
    %v1028 = vsel %vm618, %v1026, 0
    %v1031 = vsel %vm672, %v224, 0
    %1033 = vmatprep.subr.bf16.mxu0 0
    %1034 = vmatpush1.bf16.msra.mxu0 %v1031
    %1035 = vmatprep.subr.bf16.mxu0 0
    %1036 = vmatpush1.bf16.msra.mxu0 0
    %1037 = vmatprep.subr.bf16.mxu0 0
    %1038 = vmatpush1.bf16.msra.mxu0 0
    %1039 = vmatprep.subr.bf16.mxu0 0
    %1040 = vmatpush1.bf16.msra.mxu0 0
    %1041 = vmatprep.subr.bf16.mxu0 0
    %1042 = vmatpush1.bf16.msra.mxu0 0
    %1043 = vmatprep.subr.bf16.mxu0 0
    %1044 = vmatpush1.bf16.msra.mxu0 0
    %1045 = vmatprep.subr.bf16.mxu0 0
    %1046 = vmatpush1.bf16.msra.mxu0 0
    %1047 = vmatprep.subr.bf16.mxu0 0
    %1048 = vmatpush1.bf16.msra.mxu0 0
    %1049 = vmatprep.subr.bf16.mxu0 0
    %1050 = vmatpush1.bf16.msra.mxu0 0
    %1051 = vmatprep.subr.bf16.mxu0 0
    %1052 = vmatpush1.bf16.msra.mxu0 0
    %1053 = vmatprep.subr.bf16.mxu0 0
    %1054 = vmatpush1.bf16.msra.mxu0 0
    %1055 = vmatprep.subr.bf16.mxu0 0
    %1056 = vmatpush1.bf16.msra.mxu0 0
    %1057 = vmatprep.subr.bf16.mxu0 0
    %1058 = vmatpush1.bf16.msra.mxu0 0
    %1059 = vmatprep.subr.bf16.mxu0 0
    %1060 = vmatpush1.bf16.msra.mxu0 0
    %1061 = vmatprep.subr.bf16.mxu0 0
    %1062 = vmatpush1.bf16.msra.mxu0 0
    %1063 = vmatprep.subr.bf16.mxu0 0
    %1064 = vmatpush1.bf16.msra.mxu0 0
    %1065 = vmatprep.mubr.bf16.mxu0 0
    %1066 = vmatmul.mubr.bf16.gmra.mrb[0].mxu0 %v1028
    %v1067 = vpop.f32.mrb[0].mxu0
    %v1068 = vadd.f32 0.0, %v1067
    %v1069 = vpop.f32.mrb[0].mxu0
    %v1070 = vpop.f32.mrb[0].mxu0
    %v1071 = vpop.f32.mrb[0].mxu0
    %1072 = vdwg.mxu0
    %v1073 = vpack.c.bf16 %v711, %v711
    %v1074 = vpack.c.bf16 %v762, %v762
    %v1075 = vpack.c.bf16 %v813, %v813
    %v1076 = vpack.c.bf16 %v864, %v864
    %v1077 = vpack.c.bf16 %v915, %v915
    %v1078 = vpack.c.bf16 %v966, %v966
    %v1079 = vpack.c.bf16 %v1017, %v1017
    %v1080 = vpack.c.bf16 %v1068, %v1068
    %v1081 = vld [vmem:[#allocation17] sm:$0xf]
    %v1082 = vld [vmem:[#allocation17 + $0x4] sm:$0xf]
    %v1083 = vld [vmem:[#allocation17 + $0x8] sm:$0xf]
    %v1084 = vld [vmem:[#allocation17 + $0xc] sm:$0xf]
    %v1085 = vld [vmem:[#allocation19] sm:$0xf]
    %v1086 = vld [vmem:[#allocation19 + $0x4] sm:$0xf]
    %v1087 = vld [vmem:[#allocation19 + $0x8] sm:$0xf]
    %v1088 = vld [vmem:[#allocation19 + $0xc] sm:$0xf]
    %v1097 = vunpack.c.l.b16 %v1073
    %v1098 = vunpack.c.l.b16 %v1074
    %v1099 = vunpack.c.l.b16 %v1075
    %v1100 = vunpack.c.l.b16 %v1076
    %v1101 = vunpack.c.l.b16 %v1077
    %v1102 = vunpack.c.l.b16 %v1078
    %v1103 = vunpack.c.l.b16 %v1079
    %v1104 = vunpack.c.l.b16 %v1080
    %v1105 = vrot.slane %v1098, 7
    %v1106 = vsel %vm602, %v1105, %v1097
    %v1107 = vrot.slane %v1099, 6
    %v1108 = vsel %vm604, %v1107, %v1106
    %v1109 = vrot.slane %v1100, 5
    %v1110 = vsel %vm606, %v1109, %v1108
    %v1111 = vrot.slane %v1101, 4
    %v1112 = vsel %vm608, %v1111, %v1110
    %v1113 = vrot.slane %v1102, 3
    %v1114 = vsel %vm610, %v1113, %v1112
    %v1115 = vrot.slane %v1103, 2
    %v1116 = vsel %vm612, %v1115, %v1114
    %v1117 = vrot.slane %v1104, 1
    %v1118 = vsel %vm614, %v1117, %v1116
    %v1119 = vpack.c.b16 %v1118, %v1118
    %v1124 = vunpack.c.l.b16 %v1085
    %v1125 = vunpack.c.l.b16 %v1086
    %v1126 = vunpack.c.l.b16 %v1087
    %v1127 = vunpack.c.l.b16 %v1088
    %v1128 = vpack.c.b16 %v1125, %v1124
    %v1129 = vpack.c.b16 %v1127, %v1126
    %v1133 = vsel %vm241, %v1119, 0
    %1135 = vmatprep.subr.bf16.mxu0 0
    %1136 = vmatpush1.bf16.msra.mxu0 %v1128
    %1137 = vmatprep.subr.bf16.mxu0 0
    %1138 = vmatpush1.bf16.msra.mxu0 %v1129
    %1139 = vmatprep.subr.bf16.mxu0 0
    %1140 = vmatpush1.bf16.msra.mxu0 0
    %1141 = vmatprep.subr.bf16.mxu0 0
    %1142 = vmatpush1.bf16.msra.mxu0 0
    %1143 = vmatprep.subr.bf16.mxu0 0
    %1144 = vmatpush1.bf16.msra.mxu0 0
    %1145 = vmatprep.subr.bf16.mxu0 0
    %1146 = vmatpush1.bf16.msra.mxu0 0
    %1147 = vmatprep.subr.bf16.mxu0 0
    %1148 = vmatpush1.bf16.msra.mxu0 0
    %1149 = vmatprep.subr.bf16.mxu0 0
    %1150 = vmatpush1.bf16.msra.mxu0 0
    %1151 = vmatprep.subr.bf16.mxu0 0
    %1152 = vmatpush1.bf16.msra.mxu0 0
    %1153 = vmatprep.subr.bf16.mxu0 0
    %1154 = vmatpush1.bf16.msra.mxu0 0
    %1155 = vmatprep.subr.bf16.mxu0 0
    %1156 = vmatpush1.bf16.msra.mxu0 0
    %1157 = vmatprep.subr.bf16.mxu0 0
    %1158 = vmatpush1.bf16.msra.mxu0 0
    %1159 = vmatprep.subr.bf16.mxu0 0
    %1160 = vmatpush1.bf16.msra.mxu0 0
    %1161 = vmatprep.subr.bf16.mxu0 0
    %1162 = vmatpush1.bf16.msra.mxu0 0
    %1163 = vmatprep.subr.bf16.mxu0 0
    %1164 = vmatpush1.bf16.msra.mxu0 0
    %1165 = vmatprep.subr.bf16.mxu0 0
    %1166 = vmatpush1.bf16.msra.mxu0 0
    %1167 = vmatprep.mubr.bf16.mxu0 0
    %1168 = vmatmul.mubr.bf16.gmra.mrb[0].mxu0 %v1133
    %v1169 = vpop.f32.mrb[0].mxu0
    %v1170 = vadd.f32 0.0, %v1169
    %v1171 = vpop.f32.mrb[0].mxu0
    %v1172 = vpop.f32.mrb[0].mxu0
    %v1173 = vpop.f32.mrb[0].mxu0
    %1174 = vdwg.mxu0
    %v1179 = vunpack.c.l.b16 %v1081
    %v1180 = vunpack.c.l.b16 %v1082
    %v1181 = vunpack.c.l.b16 %v1083
    %v1182 = vunpack.c.l.b16 %v1084
    %v1183 = vpack.c.b16 %v1180, %v1179
    %v1184 = vpack.c.b16 %v1182, %v1181
    %v1188 = vsel %vm241, %v215, 0
    %1190 = vmatprep.subr.bf16.mxu0 0
    %1191 = vmatpush1.bf16.msra.mxu0 %v1183
    %1192 = vmatprep.subr.bf16.mxu0 0
    %1193 = vmatpush1.bf16.msra.mxu0 %v1184
    %1194 = vmatprep.subr.bf16.mxu0 0
    %1195 = vmatpush1.bf16.msra.mxu0 0
    %1196 = vmatprep.subr.bf16.mxu0 0
    %1197 = vmatpush1.bf16.msra.mxu0 0
    %1198 = vmatprep.subr.bf16.mxu0 0
    %1199 = vmatpush1.bf16.msra.mxu0 0
    %1200 = vmatprep.subr.bf16.mxu0 0
    %1201 = vmatpush1.bf16.msra.mxu0 0
    %1202 = vmatprep.subr.bf16.mxu0 0
    %1203 = vmatpush1.bf16.msra.mxu0 0
    %1204 = vmatprep.subr.bf16.mxu0 0
    %1205 = vmatpush1.bf16.msra.mxu0 0
    %1206 = vmatprep.subr.bf16.mxu0 0
    %1207 = vmatpush1.bf16.msra.mxu0 0
    %1208 = vmatprep.subr.bf16.mxu0 0
    %1209 = vmatpush1.bf16.msra.mxu0 0
    %1210 = vmatprep.subr.bf16.mxu0 0
    %1211 = vmatpush1.bf16.msra.mxu0 0
    %1212 = vmatprep.subr.bf16.mxu0 0
    %1213 = vmatpush1.bf16.msra.mxu0 0
    %1214 = vmatprep.subr.bf16.mxu0 0
    %1215 = vmatpush1.bf16.msra.mxu0 0
    %1216 = vmatprep.subr.bf16.mxu0 0
    %1217 = vmatpush1.bf16.msra.mxu0 0
    %1218 = vmatprep.subr.bf16.mxu0 0
    %1219 = vmatpush1.bf16.msra.mxu0 0
    %1220 = vmatprep.subr.bf16.mxu0 0
    %1221 = vmatpush1.bf16.msra.mxu0 0
    %1222 = vmatprep.mubr.bf16.mxu0 0
    %1223 = vmatmul.mubr.bf16.gmra.mrb[0].mxu0 %v1188
    %v1224 = vpop.f32.mrb[0].mxu0
    %v1225 = vadd.f32 %v1170, %v1224
    %v1226 = vpop.f32.mrb[0].mxu0
    %v1227 = vpop.f32.mrb[0].mxu0
    %v1228 = vpop.f32.mrb[0].mxu0
    %1229 = vdwg.mxu0
    %v1230 = vld [vmem:[#allocation20] sm:$0xf]
    %v1231 = vld [vmem:[#allocation20 + $0x4] sm:$0xf]
    %v1232 = vld [vmem:[#allocation20 + $0x8] sm:$0xf]
    %v1233 = vld [vmem:[#allocation20 + $0xc] sm:$0xf]
    %v1238 = vunpack.c.l.b16 %v1230
    %v1239 = vunpack.c.l.b16 %v1231
    %v1240 = vunpack.c.l.b16 %v1232
    %v1241 = vunpack.c.l.b16 %v1233
    %v1242 = vpack.c.b16 %v1239, %v1238
    %v1243 = vpack.c.b16 %v1241, %v1240
    %1246 = vmatprep.subr.bf16.mxu0 0
    %1247 = vmatpush1.bf16.msra.mxu0 %v1242
    %1248 = vmatprep.subr.bf16.mxu0 0
    %1249 = vmatpush1.bf16.msra.mxu0 %v1243
    %1250 = vmatprep.subr.bf16.mxu0 0
    %1251 = vmatpush1.bf16.msra.mxu0 0
    %1252 = vmatprep.subr.bf16.mxu0 0
    %1253 = vmatpush1.bf16.msra.mxu0 0
    %1254 = vmatprep.subr.bf16.mxu0 0
    %1255 = vmatpush1.bf16.msra.mxu0 0
    %1256 = vmatprep.subr.bf16.mxu0 0
    %1257 = vmatpush1.bf16.msra.mxu0 0
    %1258 = vmatprep.subr.bf16.mxu0 0
    %1259 = vmatpush1.bf16.msra.mxu0 0
    %1260 = vmatprep.subr.bf16.mxu0 0
    %1261 = vmatpush1.bf16.msra.mxu0 0
    %1262 = vmatprep.subr.bf16.mxu0 0
    %1263 = vmatpush1.bf16.msra.mxu0 0
    %1264 = vmatprep.subr.bf16.mxu0 0
    %1265 = vmatpush1.bf16.msra.mxu0 0
    %1266 = vmatprep.subr.bf16.mxu0 0
    %1267 = vmatpush1.bf16.msra.mxu0 0
    %1268 = vmatprep.subr.bf16.mxu0 0
    %1269 = vmatpush1.bf16.msra.mxu0 0
    %1270 = vmatprep.subr.bf16.mxu0 0
    %1271 = vmatpush1.bf16.msra.mxu0 0
    %1272 = vmatprep.subr.bf16.mxu0 0
    %1273 = vmatpush1.bf16.msra.mxu0 0
    %1274 = vmatprep.subr.bf16.mxu0 0
    %1275 = vmatpush1.bf16.msra.mxu0 0
    %1276 = vmatprep.subr.bf16.mxu0 0
    %1277 = vmatpush1.bf16.msra.mxu0 0
    %1278 = vmatprep.mubr.bf16.mxu0 0
    %1279 = vmatmul.mubr.bf16.gmra.mrb[0].mxu0 %v243
    %v1280 = vpop.f32.mrb[0].mxu0
    %v1281 = vadd.f32 0.0, %v1280
    %v1282 = vpop.f32.mrb[0].mxu0
    %v1283 = vpop.f32.mrb[0].mxu0
    %v1284 = vpop.f32.mrb[0].mxu0
    %1285 = vdwg.mxu0
    %v1286 = vadd.f32 %v1225, %v1281
    %v1287 = vld [vmem:[#allocation22] sm:$0x1]
    %v1289 = vlaneseq
    %v1290 = vshrl.u32 %v1289, 7
    %v1291 = vsub.s32 0, %v1290
    %v1292 = vrot.slane %v1287, %v1291
    %v1294 = vadd.f32 %v1286, %v1292
    %v1295 = vxor.u32 %v1294, 2147483648
    %v1296 = vmul.f32 %v1295, 1.442695
    %v1297 = vpow.pop %v1296
    %v1298 = vadd.f32 %v1297, 1.0
    %v1299 = vrcp.pop %v1298
    %v1300 = vmul.f32 1.0, %v1299
    %v1301 = vtanh.pop %v1294
    %v1302 = vld [vmem:[#allocation7] sm:$0xff]
    %1304 = vrot.lane.b32.xlu0 %v1302, 32
    %v1305 = vpop.permute.xlu0 %1304
    %v1307 = vmul.f32 %v1300, %v1305
    %1309 = vrot.lane.b32.xlu0 %v1301, 64
    %v1310 = vpop.permute.xlu0 %1309
    %v1312 = vmul.f32 %v1300, %v1310
    %1314 = vrot.lane.b32.xlu0 %v1312, 32
    %v1315 = vpop.permute.xlu0 %1314
    %v1317 = vadd.f32 %v1307, %v1315
    %v1318 = vtanh.pop %v1317
    %1320 = vrot.lane.b32.xlu0 %v1318, 64
    %v1321 = vpop.permute.xlu0 %1320
    %v1323 = vmul.f32 %v1300, %v1321
    %1325 = vrot.lane.b32.xlu0 %v1323, 32
    %v1326 = vpop.permute.xlu0 %1325
    %1328 = vst.msk [vmem:[#allocation23] sm:$0xff] %vm241, %v1326
    %1330 = vrot.lane.b32.xlu0 %v1317, 96
    %v1331 = vpop.permute.xlu0 %1330
    %1333 = vst.msk [vmem:[#allocation24] sm:$0xff] %vm241, %v1331
    %1334 = vst.msk [vmem:[#allocation26] sm:$0xff] %vm618, %v629
    %v1335 = vpack.c.bf16 %v1323, %v1323
    %v1337 = vunpack.c.l.b16 %v1335
    %v1338 = vpack.c.b16 %v1337, %v1337
    %1339 = vrot.lane.b32.xlu0 %v1338, 32
    %v1340 = vpop.permute.xlu0 %1339
    %vm1342 = vcmask 257024
    %1343 = vst.msk [vmem:[#allocation27] sm:$0xf] %vm1342, %v1340
    %v1344 = vpack.c.b16 %v1097, %v1097
    %v1345 = vpack.c.b16 %v1098, %v1098
    %v1346 = vpack.c.b16 %v1099, %v1099
    %v1347 = vpack.c.b16 %v1100, %v1100
    %v1348 = vpack.c.b16 %v1101, %v1101
    %v1349 = vpack.c.b16 %v1102, %v1102
    %v1350 = vpack.c.b16 %v1103, %v1103
    %v1351 = vpack.c.b16 %v1104, %v1104
    %v1352 = vunpack.c.l.b16 %v1344
    %v1353 = vunpack.c.l.b16 %v1345
    %v1354 = vunpack.c.l.b16 %v1346
    %v1355 = vunpack.c.l.b16 %v1347
    %v1356 = vunpack.c.l.b16 %v1348
    %v1357 = vunpack.c.l.b16 %v1349
    %v1358 = vunpack.c.l.b16 %v1350
    %v1359 = vunpack.c.l.b16 %v1351
    %v1360 = vrot.slane %v1353, 7
    %v1361 = vsel %vm602, %v1360, %v1352
    %v1362 = vrot.slane %v1354, 6
    %v1363 = vsel %vm604, %v1362, %v1361
    %v1364 = vrot.slane %v1355, 5
    %v1365 = vsel %vm606, %v1364, %v1363
    %v1366 = vrot.slane %v1356, 4
    %v1367 = vsel %vm608, %v1366, %v1365
    %v1368 = vrot.slane %v1357, 3
    %v1369 = vsel %vm610, %v1368, %v1367
    %v1370 = vrot.slane %v1358, 2
    %v1371 = vsel %vm612, %v1370, %v1369
    %v1372 = vrot.slane %v1359, 1
    %v1373 = vsel %vm614, %v1372, %v1371
    %v1374 = vpack.c.b16 %v1373, %v1373
    %1376 = vst.msk [vmem:[#allocation29] sm:$0xf] %vm1342, %v1374
    // Predicated region
    $region106: #{tpu_custom_call.1} parent=1 // pred_check
      _
    $region107: #{tpu_custom_call.1} parent=1 // pred_check_branch
      %1378 = sbr.rel (0) target = $region109
    $region108: #{tpu_custom_call.1} parent=1 // pred_region
      %s1380 = ssub.s32 128, 128
      %1381 = vsyncadd [#allocation4], %s1380
      %s1383 = sshll.u32 [#allocation23], 4
      %s1384 = int_to_ptr.vmem [resolvable:$true] %s1383
      %1386 = dma.vmem_to_hbm [thread:$0]  %s1384, 128, %s13, [#allocation4]
    $region109: #{tpu_custom_call.1} parent=1 // pred_fallthru
      _
    // Predicated region
    $region110: #{tpu_custom_call.1} parent=1 // pred_check
      _
    $region111: #{tpu_custom_call.1} parent=1 // pred_check_branch
      %1388 = sbr.rel (0) target = $region113
    $region112: #{tpu_custom_call.1} parent=1 // pred_region
      %s1390 = ssub.s32 128, 128
      %1391 = vsyncadd [#allocation25], %s1390
      %s1393 = sshll.u32 [#allocation24], 4
      %s1394 = int_to_ptr.vmem [resolvable:$true] %s1393
      %1396 = dma.vmem_to_hbm [thread:$0]  %s1394, 128, %s14, [#allocation25]
    $region113: #{tpu_custom_call.1} parent=1 // pred_fallthru
      _
    // Predicated region
    $region114: #{tpu_custom_call.1} parent=1 // pred_check
      _
    $region115: #{tpu_custom_call.1} parent=1 // pred_check_branch
      %1398 = sbr.rel (0) target = $region117
    $region116: #{tpu_custom_call.1} parent=1 // pred_region
      %s1400 = ssub.s32 128, 128
      %1401 = vsyncadd [#allocation25], %s1400
      %s1403 = sshll.u32 [#allocation26], 4
      %s1404 = int_to_ptr.vmem [resolvable:$true] %s1403
      %1406 = dma.vmem_to_hbm [thread:$0]  %s1404, 128, %s15, [#allocation25]
    $region117: #{tpu_custom_call.1} parent=1 // pred_fallthru
      _
    // Predicated region
    $region118: #{tpu_custom_call.1} parent=1 // pred_check
      _
    $region119: #{tpu_custom_call.1} parent=1 // pred_check_branch
      %1408 = sbr.rel (0) target = $region121
    $region120: #{tpu_custom_call.1} parent=1 // pred_region
      %s1410 = ssub.s32 64, 64
      %1411 = vsyncadd [#allocation28], %s1410
      %s1413 = sshll.u32 [#allocation27], 4
      %s1414 = int_to_ptr.vmem [resolvable:$true] %s1413
      %1416 = dma.vmem_to_hbm [thread:$0]  %s1414, 64, %s16, [#allocation28]
    $region121: #{tpu_custom_call.1} parent=1 // pred_fallthru
      _
    // Predicated region
    $region122: #{tpu_custom_call.1} parent=1 // pred_check
      _
    $region123: #{tpu_custom_call.1} parent=1 // pred_check_branch
      %1418 = sbr.rel (0) target = $region125
    $region124: #{tpu_custom_call.1} parent=1 // pred_region
      %s1420 = ssub.s32 64, 64
      %1421 = vsyncadd [#allocation28], %s1420
      %s1423 = sshll.u32 [#allocation29], 4
      %s1424 = int_to_ptr.vmem [resolvable:$true] %s1423
      %1426 = dma.vmem_to_hbm [thread:$0]  %s1424, 64, %s17, [#allocation28]
    $region125: #{tpu_custom_call.1} parent=1 // pred_fallthru
      _
    // Predicated region
    $region126: #{tpu_custom_call.1} parent=1 // pred_check
      _
    $region127: #{tpu_custom_call.1} parent=1 // pred_check_branch
      %1428 = sbr.rel (0) target = $region129
    $region128: #{tpu_custom_call.1} parent=1 // pred_region
      %1429 = dma.done [#allocation4], 128
    $region129: #{tpu_custom_call.1} parent=1 // pred_fallthru
      _
    // Predicated region
    $region130: #{tpu_custom_call.1} parent=1 // pred_check
      _
    $region131: #{tpu_custom_call.1} parent=1 // pred_check_branch
      %1431 = sbr.rel (0) target = $region133
    $region132: #{tpu_custom_call.1} parent=1 // pred_region
      %1432 = dma.done [#allocation25], 128
    $region133: #{tpu_custom_call.1} parent=1 // pred_fallthru
      _
    // Predicated region
    $region134: #{tpu_custom_call.1} parent=1 // pred_check
      _
    $region135: #{tpu_custom_call.1} parent=1 // pred_check_branch
      %1434 = sbr.rel (0) target = $region137
    $region136: #{tpu_custom_call.1} parent=1 // pred_region
      %1435 = dma.done [#allocation25], 128
    $region137: #{tpu_custom_call.1} parent=1 // pred_fallthru
      _
    // Predicated region
    $region138: #{tpu_custom_call.1} parent=1 // pred_check
      _
    $region139: #{tpu_custom_call.1} parent=1 // pred_check_branch
      %1437 = sbr.rel (0) target = $region141
    $region140: #{tpu_custom_call.1} parent=1 // pred_region
      %1438 = dma.done [#allocation28], 64
    $region141: #{tpu_custom_call.1} parent=1 // pred_fallthru
      _
    // Predicated region
    $region142: #{tpu_custom_call.1} parent=1 // pred_check
      _
    $region143: #{tpu_custom_call.1} parent=1 // pred_check_branch
      %1440 = sbr.rel (0) target = $region145
    $region144: #{tpu_custom_call.1} parent=1 // pred_region
      %1441 = dma.done [#allocation28], 64
    $region145: #{tpu_custom_call.1} parent=1 // pred_fallthru
      _
    %1442 = vsyncpa [#allocation3], 1
    %1443 = vsyncpa [#allocation6], 1
    %1444 = vsyncpa [#allocation9], 1
    %1445 = vsyncpa [#allocation12], 1
    %1446 = vsyncpa [#allocation15], 1
    %1447 = vsyncpa [#allocation18], 1
    %1448 = vsyncpa [#allocation21], 1
    %1449 = vsyncpa [#allocation4], 1
    %1450 = vsyncpa [#allocation25], 1
    %1451 = vsyncpa [#allocation28], 1

</llo_original>
